<compile_context>
chip_gen: v5e
topology: v5e:2x2
jax: 0.10.0
libtpu: 0.0.40
codegen_flags: <defaults>
</compile_context>

<pallas_src>
import functools
import math

import jax
import jax.numpy as jnp
import numpy as np
from jax.experimental import pallas as pl
from jax.experimental.pallas import tpu as pltpu

# Switch to False for exact-division eval parity (softmax denom + erf rational).
_APPROX_RECIP = True


# ----------------------------- in-kernel math ------------------------------

def _layernorm(x, w, b, eps=1e-5):
    # x: (N, C) f32, w/b: (1, C) f32   (F.layer_norm: biased variance, eps=1e-5)
    mu = jnp.mean(x, axis=-1, keepdims=True)
    xc = x - mu
    var = jnp.mean(xc * xc, axis=-1, keepdims=True)
    return xc * jax.lax.rsqrt(var + eps) * w + b


def _erf(x):
    # Abramowitz & Stegun 7.1.26 rational approximation (|err| < 1.5e-7).
    # Divide routed to the EUP via pl.reciprocal; exp also EUP -> cheap on the VALU.
    a1, a2, a3, a4, a5 = 0.254829592, -0.284496736, 1.421413741, -1.453152027, 1.061405429
    p = 0.3275911
    sgn = jnp.where(x >= 0.0, 1.0, -1.0)
    ax = jnp.abs(x)
    t = pl.reciprocal(1.0 + p * ax, approx=_APPROX_RECIP)
    poly = ((((a5 * t + a4) * t + a3) * t + a2) * t + a1) * t
    return sgn * (1.0 - poly * jnp.exp(-ax * ax))


def _gelu_exact(x):
    # matches torch.nn.GELU() (erf-based, approximate='none')
    return 0.5 * x * (1.0 + _erf(x * (1.0 / math.sqrt(2.0))))


# ------------------------------ Pallas kernels ------------------------------

def blocks_kernel(x_ref,
                  ln1w_ref, ln1b_ref, wqkv_ref, bqkv_ref, wproj_ref, bproj_ref,
                  ln2w_ref, ln2b_ref, wfc_ref, bfc_ref, wfc2_ref, bfc2_ref,
                  lnfw_ref, lnfb_ref,
                  out_ref, res_ref, *, n_head):
    """All transformer blocks for the whole batch.

    grid = (n_layer,) [arbitrary]. The (B, T, C) residual stream lives in a VMEM
    scratch buffer across the layer axis; the stacked per-layer weights stream
    through VMEM (double-buffered: layer L+1 prefetches while layer L computes).
    The only HBM output is ln_f(last-token hidden) of shape (B, C).
    """
    layer = pl.program_id(0)

    @pl.when(layer == 0)
    def _():
        res_ref[...] = x_ref[...]          # initialize the residual carry

    x = res_ref[...]                        # (B, T, C) f32
    B, T, C = x.shape
    H = n_head
    hd = C // H
    x2 = x.reshape(B * T, C)                # merge leading dims; lane dim untouched

    # ---------------- attention sub-block ----------------
    h = _layernorm(x2, ln1w_ref[...], ln1b_ref[...])
    # 1/sqrt(hd) is pre-folded (host-side, one time) into the Q columns of w_qkv/b_qkv.
    qkv = jnp.dot(h.astype(jnp.bfloat16), wqkv_ref[...],
                  preferred_element_type=jnp.float32) + bqkv_ref[...]   # (BT, 3C) f32

    def heads(z):   # (BT, C) -> (B*H, T, hd) bf16 via one reshape+transpose relayout
        z4 = z.reshape(B, T, H, hd)
        z4 = jnp.transpose(z4, (0, 2, 1, 3))
        return z4.reshape(B * H, T, hd).astype(jnp.bfloat16)

    qh = heads(qkv[:, 0:C])
    kh = heads(qkv[:, C:2 * C])
    vh = heads(qkv[:, 2 * C:3 * C])

    # Query-tiled attention: K/V stay resident; scores materialize only (B*H, TQ, T)
    # per tile (no full (H,T,T) buffer). Softmax normalization deferred to a single
    # EUP reciprocal. Causal mask generated in-kernel via broadcasted_iota
    # (matches get_mask_for_batch(..., causal_pos=0) == tril).
    TQ = min(T, 256)
    y_tiles = []
    for q0 in range(0, T, TQ):
        tq = min(TQ, T - q0)
        row = jax.lax.broadcasted_iota(jnp.int32, (tq, T), 0) + q0
        col = jax.lax.broadcasted_iota(jnp.int32, (tq, T), 1)
        attn_bias = jnp.where(row >= col, 0.0, -1e30).astype(jnp.float32)   # (tq, T)
        s = jnp.einsum('ntd,nsd->nts', qh[:, q0:q0 + tq, :], kh,
                       preferred_element_type=jnp.float32) + attn_bias[None]
        m = jnp.max(s, axis=-1, keepdims=True)
        p = jnp.exp(s - m)                                   # unnormalized probs, f32
        denom = jnp.sum(p, axis=-1, keepdims=True)           # (B*H, tq, 1)
        yt = jnp.einsum('nts,nsd->ntd', p.astype(jnp.bfloat16), vh,
                        preferred_element_type=jnp.float32)  # (B*H, tq, hd)
        y_tiles.append(yt * pl.reciprocal(denom, approx=_APPROX_RECIP))
    y = y_tiles[0] if len(y_tiles) == 1 else jnp.concatenate(y_tiles, axis=1)
    y = jnp.transpose(y.reshape(B, H, T, hd), (0, 2, 1, 3)).reshape(B * T, C)

    attn = jnp.dot(y.astype(jnp.bfloat16), wproj_ref[...],
                   preferred_element_type=jnp.float32) + bproj_ref[...]
    x2 = x2 + attn

    # ---------------- MLP sub-block ----------------
    h2 = _layernorm(x2, ln2w_ref[...], ln2b_ref[...])
    a = jnp.dot(h2.astype(jnp.bfloat16), wfc_ref[...],
                preferred_element_type=jnp.float32) + bfc_ref[...]
    a = _gelu_exact(a)
    mlp = jnp.dot(a.astype(jnp.bfloat16), wfc2_ref[...],
                  preferred_element_type=jnp.float32) + bfc2_ref[...]
    x2 = x2 + mlp

    xn = x2.reshape(B, T, C)
    res_ref[...] = xn                       # residual carry stays in VMEM scratch
    # ln_f of the last token recomputed per layer (B*C elems, negligible); only the
    # final layer's value survives in the resident output block.
    out_ref[...] = _layernorm(xn[:, T - 1, :], lnfw_ref[...], lnfb_ref[...])


def head_kernel(h_ref, wte_ref, out_ref):
    """Tied lm_head for one vocab tile (grid axis = vocab tiles).

    Contracts C of the (already ln_f'd) hidden states against C of wte (V, C)
    directly, so no (C, V) transpose is ever materialized.
    """
    out_ref[...] = jax.lax.dot_general(
        h_ref[...].astype(jnp.bfloat16), wte_ref[...],
        (((1,), (1,)), ((), ())),
        preferred_element_type=jnp.float32)                        # (Bp, tv)


# ------------------------------- wrappers -----------------------------------

def _fold_q_scale(params, n_head):
    """One-time host-side prep: fold 1/sqrt(hd) into the Q columns of w_qkv/b_qkv."""
    w, b = params['w_qkv'], params['b_qkv']
    C = w.shape[1]
    hd = C // n_head
    colscale = jnp.concatenate([jnp.full((C,), 1.0 / math.sqrt(hd), jnp.float32),
                                jnp.ones((2 * C,), jnp.float32)])
    p2 = dict(params)
    p2['w_qkv'] = (w.astype(jnp.float32) * colscale).astype(w.dtype)
    p2['b_qkv'] = b * colscale
    return p2


def blocks_call(x, p, n_head):
    B, T, C = x.shape
    L = p['w_qkv'].shape[0]

    def wspec(shape):
        # stacked per-layer parameter: squeeze the layer dim, index by grid layer
        return pl.BlockSpec((None,) + shape, lambda l: (l,) + (0,) * len(shape))

    kern = functools.partial(blocks_kernel, n_head=n_head)

    # --- explicit VMEM budget: double-buffered layer weights + activation temps ---
    wbytes = 12 * C * C * 2 + 13 * C * 4          # bf16 weights + f32 biases, one layer
    act = B * T * C * 4                           # one residual-sized f32 buffer
    TQ = min(T, 256)
    scores = B * n_head * TQ * T * 4
    est = 2 * wbytes + 10 * act + 3 * scores + (4 << 20)
    vmem_limit = int(min(max(est, 32 << 20), 128 << 20))
    # TODO(synk): cap at 64 MiB and split attn/MLP weight streaming for v7x at large C.

    flops = L * B * (24 * T * C * C + 4 * T * T * C)
    transcendentals = L * B * (n_head * T * T + 8 * T * C)
    # weights stream from HBM exactly once per layer; x read once; (B, C) written once
    bytes_accessed = L * wbytes + B * T * C * 4 + B * C * 4

    return pl.pallas_call(
        kern,
        out_shape=jax.ShapeDtypeStruct((B, C), jnp.float32),
        grid=(L,),
        in_specs=[
            pl.BlockSpec((B, T, C), lambda l: (0, 0, 0)),          # x: fetched once
            wspec((1, C)), wspec((1, C)),                          # ln1 w, b
            wspec((C, 3 * C)), wspec((1, 3 * C)),                  # c_attn
            wspec((C, C)), wspec((1, C)),                          # attn c_proj
            wspec((1, C)), wspec((1, C)),                          # ln2 w, b
            wspec((C, 4 * C)), wspec((1, 4 * C)),                  # mlp c_fc
            wspec((4 * C, C)), wspec((1, C)),                      # mlp c_proj
            pl.BlockSpec((1, C), lambda l: (0, 0)),                # ln_f w
            pl.BlockSpec((1, C), lambda l: (0, 0)),                # ln_f b
        ],
        # constant block index -> output stays resident, one HBM writeback at the end
        out_specs=pl.BlockSpec((B, C), lambda l: (0, 0)),
        scratch_shapes=[pltpu.VMEM((B, T, C), jnp.float32)],       # residual carry
        compiler_params=pltpu.CompilerParams(
            dimension_semantics=("arbitrary",),
            vmem_limit_bytes=vmem_limit),
        cost_estimate=pl.CostEstimate(flops=flops,
                                      transcendentals=transcendentals,
                                      bytes_accessed=bytes_accessed),
    )(x,
      p['ln1_w'], p['ln1_b'], p['w_qkv'], p['b_qkv'], p['w_proj'], p['b_proj'],
      p['ln2_w'], p['ln2_b'], p['w_fc'], p['b_fc'], p['w_fc2'], p['b_fc2'],
      p['lnf_w'], p['lnf_b'])


def head_call(h_last, wte):
    B, C = h_last.shape
    V = wte.shape[0]

    Bp = ((B + 7) // 8) * 8                        # pad sublanes -> unmasked stores
    if Bp != B:
        h_last = jnp.pad(h_last, ((0, Bp - B), (0, 0)))

    tv = V
    for cand in (8192, 4096, 2048):                # big tiles amortize per-step overhead
        if V % cand == 0 and V > cand:
            tv = cand
            break
    # TODO(synk): pad the vocab to a tile multiple for vocabs not divisible by tv.

    vmem_limit = int(min(max(4 * tv * C * 2 + 2 * Bp * tv * 4 + Bp * C * 4 + (4 << 20),
                             16 << 20), 128 << 20))

    logits = pl.pallas_call(
        head_kernel,
        out_shape=jax.ShapeDtypeStruct((Bp, V), jnp.float32),
        grid=(V // tv,),
        in_specs=[
            pl.BlockSpec((Bp, C), lambda v: (0, 0)),     # ln_f'd hiddens (resident)
            pl.BlockSpec((tv, C), lambda v: (v, 0)),     # wte vocab tile (bf16)
        ],
        out_specs=pl.BlockSpec((Bp, tv), lambda v: (0, v)),
        compiler_params=pltpu.CompilerParams(
            dimension_semantics=("parallel",),
            vmem_limit_bytes=vmem_limit),
        cost_estimate=pl.CostEstimate(flops=2 * Bp * C * V, transcendentals=0,
                                      bytes_accessed=V * C * 2 + Bp * C * 4 + Bp * V * 4),
    )(h_last, wte)
    return logits[:B]


def gpt_forward(idx, params, n_head):
    """GPTBase.forward with defaults (pe='learnable', targets=None, causal_pos=0)."""
    B, T = idx.shape

    # one-time param prep (hoist out of decode loops in real use)
    p = _fold_q_scale(params, n_head)

    # embedding gather + learnable positional embedding (glue; dropout=0 -> identity)
    tok_emb = p['wte'][idx].astype(jnp.float32)          # (B, T, C)
    pos_emb = p['wpe'][:T]                               # (T, C) f32
    x = tok_emb + pos_emb[None, :, :]

    h_last = blocks_call(x, p, n_head)                   # (B, C) = ln_f(blocks(x))[:, -1]
    logits = head_call(h_last, p['wte'])
    return logits[:, None, :]                            # (B, 1, V)


# ------------------------- deterministic parameters -------------------------

def init_params(key, V, T_eff, C, n_layer):
    std = 0.02
    proj_std = 0.02 / math.sqrt(2 * n_layer)             # c_proj.weight special init
    keys = jax.random.split(key, 2 + 4 * n_layer)
    wte = (jax.random.normal(keys[0], (V, C), jnp.float32) * std).astype(jnp.bfloat16)
    wpe = jax.random.normal(keys[1], (T_eff, C), jnp.float32) * std

    def stack_normal(ks, shape, scale):
        return jnp.stack([jax.random.normal(k, shape, jnp.float32) * scale for k in ks])

    kq = keys[2:2 + n_layer]
    kp = keys[2 + n_layer:2 + 2 * n_layer]
    kf = keys[2 + 2 * n_layer:2 + 3 * n_layer]
    kf2 = keys[2 + 3 * n_layer:2 + 4 * n_layer]

    return dict(
        wte=wte, wpe=wpe,
        ln1_w=jnp.ones((n_layer, 1, C), jnp.float32),
        ln1_b=jnp.zeros((n_layer, 1, C), jnp.float32),
        w_qkv=stack_normal(kq, (C, 3 * C), std).astype(jnp.bfloat16),
        b_qkv=jnp.zeros((n_layer, 1, 3 * C), jnp.float32),
        w_proj=stack_normal(kp, (C, C), proj_std).astype(jnp.bfloat16),
        b_proj=jnp.zeros((n_layer, 1, C), jnp.float32),
        ln2_w=jnp.ones((n_layer, 1, C), jnp.float32),
        ln2_b=jnp.zeros((n_layer, 1, C), jnp.float32),
        w_fc=stack_normal(kf, (C, 4 * C), std).astype(jnp.bfloat16),
        b_fc=jnp.zeros((n_layer, 1, 4 * C), jnp.float32),
        w_fc2=stack_normal(kf2, (4 * C, C), proj_std).astype(jnp.bfloat16),
        b_fc2=jnp.zeros((n_layer, 1, C), jnp.float32),
        lnf_w=jnp.ones((1, C), jnp.float32),
        lnf_b=jnp.zeros((1, C), jnp.float32),
    )


# --------------------------- pure-JAX reference ------------------------------

def _ref_ln(x, w, b, eps=1e-5):
    mu = x.mean(-1, keepdims=True)
    var = ((x - mu) ** 2).mean(-1, keepdims=True)
    return (x - mu) / jnp.sqrt(var + eps) * w.reshape(-1) + b.reshape(-1)


def ref_forward(idx, params, n_head):
    B, T = idx.shape
    C = params['wpe'].shape[1]
    hd = C // n_head
    f32 = jnp.float32
    x = params['wte'].astype(f32)[idx] + params['wpe'][:T][None]
    mask = jnp.tril(jnp.ones((T, T), f32))
    n_layer = params['w_qkv'].shape[0]
    for li in range(n_layer):
        w_qkv = params['w_qkv'][li].astype(f32)
        w_proj = params['w_proj'][li].astype(f32)
        w_fc = params['w_fc'][li].astype(f32)
        w_fc2 = params['w_fc2'][li].astype(f32)
        h = _ref_ln(x, params['ln1_w'][li], params['ln1_b'][li])
        qkv = h @ w_qkv + params['b_qkv'][li].reshape(-1)
        q, k, v = qkv[..., :C], qkv[..., C:2 * C], qkv[..., 2 * C:]
        q = q.reshape(B, T, n_head, hd).transpose(0, 2, 1, 3)
        k = k.reshape(B, T, n_head, hd).transpose(0, 2, 1, 3)
        v = v.reshape(B, T, n_head, hd).transpose(0, 2, 1, 3)
        s = jnp.einsum('bhqd,bhkd->bhqk', q, k) / math.sqrt(hd)
        s = jnp.where(mask[None, None] > 0.5, s, -jnp.inf)
        a = jax.nn.softmax(s, axis=-1)
        y = jnp.einsum('bhqk,bhkd->bhqd', a, v).transpose(0, 2, 1, 3).reshape(B, T, C)
        x = x + (y @ w_proj + params['b_proj'][li].reshape(-1))
        h2 = _ref_ln(x, params['ln2_w'][li], params['ln2_b'][li])
        g = h2 @ w_fc + params['b_fc'][li].reshape(-1)
        g = 0.5 * g * (1.0 + jax.scipy.special.erf(g / math.sqrt(2.0)))
        x = x + (g @ w_fc2 + params['b_fc2'][li].reshape(-1))
    h = _ref_ln(x[:, -1, :], params['lnf_w'], params['lnf_b'])
    return (h @ params['wte'].astype(f32).T)[:, None, :]


# ---------------------------------- main -------------------------------------

if __name__ == "__main__":
    # small shapes consistent with the module: vocab=64, seq=8, embd=32, heads=4.
    # NOTE: C=32 / hd=8 is correctness-only (sub-128 lane tiles); benchmark at
    # realistic C and head_dim >= 128 for MXU-width hygiene.
    B, T, C, N_HEAD, N_LAYER, V = 2, 8, 32, 4, 2, 64

    key = jax.random.PRNGKey(0)
    pkey, ikey = jax.random.split(key)
    params = init_params(pkey, V, T, C, N_LAYER)
    idx = jax.random.randint(ikey, (B, T), 0, V, dtype=jnp.int32)

    logits = gpt_forward(idx, params, N_HEAD)
    logits = jax.block_until_ready(logits)
    assert logits.shape == (B, 1, V), logits.shape

    ref = ref_forward(idx, params, N_HEAD)
    # tolerance loosened vs. pure-f32: kernels use bf16 MXU operands (f32 accum)
    # and EUP approx reciprocals in the softmax scale and erf rational.
    np.testing.assert_allclose(np.asarray(logits, dtype=np.float32),
                               np.asarray(ref, dtype=np.float32),
                               atol=2e-2, rtol=2e-2)
    print("KERNEL_OK")
</pallas_src>

<mosaic_0001>
module attributes {stable_mosaic.version = 11 : i64} {
  func.func @blocks_kernel(%arg0: i32, %arg1: memref<2x8x32xf32, #tpu.memory_space<vmem>>, %arg2: memref<1x1x32xf32, #tpu.memory_space<vmem>>, %arg3: memref<1x1x32xf32, #tpu.memory_space<vmem>>, %arg4: memref<1x32x96xbf16, #tpu.memory_space<vmem>>, %arg5: memref<1x1x96xf32, #tpu.memory_space<vmem>>, %arg6: memref<1x32x32xbf16, #tpu.memory_space<vmem>>, %arg7: memref<1x1x32xf32, #tpu.memory_space<vmem>>, %arg8: memref<1x1x32xf32, #tpu.memory_space<vmem>>, %arg9: memref<1x1x32xf32, #tpu.memory_space<vmem>>, %arg10: memref<1x32x128xbf16, #tpu.memory_space<vmem>>, %arg11: memref<1x1x128xf32, #tpu.memory_space<vmem>>, %arg12: memref<1x128x32xbf16, #tpu.memory_space<vmem>>, %arg13: memref<1x1x32xf32, #tpu.memory_space<vmem>>, %arg14: memref<1x32xf32, #tpu.memory_space<vmem>>, %arg15: memref<1x32xf32, #tpu.memory_space<vmem>>, %arg16: memref<2x32xf32, #tpu.memory_space<vmem>>, %arg17: memref<2x8x32xf32, #tpu.memory_space<vmem>>) attributes {dimension_semantics = [#tpu.dimension_semantics<arbitrary>], iteration_bounds = array<i64: 2>, scalar_prefetch = 0 : i64, scratch_operands = 1 : i64, tpu.core_type = #tpu.core_type<tc>, window_params = [{pipeline_mode = #tpu.pipeline_mode<synchronous>, transform_indices = @transform_0, window_bounds = array<i64: 2, 8, 32>}, {transform_indices = @transform_1, window_bounds = array<i64: 1, 1, 32>}, {transform_indices = @transform_2, window_bounds = array<i64: 1, 1, 32>}, {transform_indices = @transform_3, window_bounds = array<i64: 1, 32, 96>}, {transform_indices = @transform_4, window_bounds = array<i64: 1, 1, 96>}, {transform_indices = @transform_5, window_bounds = array<i64: 1, 32, 32>}, {transform_indices = @transform_6, window_bounds = array<i64: 1, 1, 32>}, {transform_indices = @transform_7, window_bounds = array<i64: 1, 1, 32>}, {transform_indices = @transform_8, window_bounds = array<i64: 1, 1, 32>}, {transform_indices = @transform_9, window_bounds = array<i64: 1, 32, 128>}, {transform_indices = @transform_10, window_bounds = array<i64: 1, 1, 128>}, {transform_indices = @transform_11, window_bounds = array<i64: 1, 128, 32>}, {transform_indices = @transform_12, window_bounds = array<i64: 1, 1, 32>}, {pipeline_mode = #tpu.pipeline_mode<synchronous>, transform_indices = @transform_13, window_bounds = array<i64: 1, 32>}, {pipeline_mode = #tpu.pipeline_mode<synchronous>, transform_indices = @transform_14, window_bounds = array<i64: 1, 32>}, {pipeline_mode = #tpu.pipeline_mode<synchronous>, transform_indices = @transform_15, window_bounds = array<i64: 2, 32>}]} {
    %c0_i32 = arith.constant 0 : i32
    %0 = arith.cmpi eq, %arg0, %c0_i32 : i32
    %1 = arith.extui %0 : i1 to i32
    %c0_i32_0 = arith.constant 0 : i32
    %2 = arith.cmpi ne, %1, %c0_i32_0 : i32
    scf.if %2 {
      %c0_88 = arith.constant 0 : index
      %c0_89 = arith.constant 0 : index
      %c0_90 = arith.constant 0 : index
      %196 = vector.load %arg1[%c0_88, %c0_89, %c0_90] : memref<2x8x32xf32, #tpu.memory_space<vmem>>, vector<2x8x32xf32>
      %c0_91 = arith.constant 0 : index
      %c0_92 = arith.constant 0 : index
      %c0_93 = arith.constant 0 : index
      %197 = vector.load %arg17[%c0_91, %c0_92, %c0_93] : memref<2x8x32xf32, #tpu.memory_space<vmem>>, vector<2x8x32xf32>
      tpu.vector_store %arg17[%c0_91, %c0_92, %c0_93], %196 {strides = array<i32>} : memref<2x8x32xf32, #tpu.memory_space<vmem>>, vector<2x8x32xf32>,
    } else {
    }
    %c0 = arith.constant 0 : index
    %c0_1 = arith.constant 0 : index
    %c0_2 = arith.constant 0 : index
    %3 = vector.load %arg17[%c0, %c0_1, %c0_2] : memref<2x8x32xf32, #tpu.memory_space<vmem>>, vector<2x8x32xf32>
    %4 = vector.shape_cast %3 : vector<2x8x32xf32> to vector<16x32xf32>
    %c0_3 = arith.constant 0 : index
    %c0_4 = arith.constant 0 : index
    %c0_5 = arith.constant 0 : index
    %5 = vector.load %arg2[%c0_3, %c0_4, %c0_5] : memref<1x1x32xf32, #tpu.memory_space<vmem>>, vector<1x1x32xf32>
    %6 = vector.shape_cast %5 : vector<1x1x32xf32> to vector<1x32xf32>
    %c0_6 = arith.constant 0 : index
    %c0_7 = arith.constant 0 : index
    %c0_8 = arith.constant 0 : index
    %7 = vector.load %arg3[%c0_6, %c0_7, %c0_8] : memref<1x1x32xf32, #tpu.memory_space<vmem>>, vector<1x1x32xf32>
    %8 = vector.shape_cast %7 : vector<1x1x32xf32> to vector<1x32xf32>
    %cst = arith.constant dense<0.000000e+00> : vector<16xf32>
    %9 = vector.multi_reduction <add>, %4, %cst [1] : vector<16x32xf32> to vector<16xf32>
    %10 = vector.shape_cast %9 : vector<16xf32> to vector<16x1xf32>
    %cst_9 = arith.constant 3.200000e+01 : f32
    %11 = vector.broadcast %cst_9 : f32 to vector<16x1xf32>
    %12 = arith.divf %10, %11 : vector<16x1xf32>
    %13 = vector.broadcast %12 : vector<16x1xf32> to vector<16x32xf32>
    %14 = arith.subf %4, %13 : vector<16x32xf32>
    %15 = arith.mulf %14, %14 : vector<16x32xf32>
    %cst_10 = arith.constant dense<0.000000e+00> : vector<16xf32>
    %16 = vector.multi_reduction <add>, %15, %cst_10 [1] : vector<16x32xf32> to vector<16xf32>
    %17 = vector.shape_cast %16 : vector<16xf32> to vector<16x1xf32>
    %cst_11 = arith.constant 3.200000e+01 : f32
    %18 = vector.broadcast %cst_11 : f32 to vector<16x1xf32>
    %19 = arith.divf %17, %18 : vector<16x1xf32>
    %cst_12 = arith.constant 9.99999974E-6 : f32
    %20 = vector.broadcast %cst_12 : f32 to vector<16x1xf32>
    %21 = arith.addf %19, %20 : vector<16x1xf32>
    %22 = math.rsqrt %21 : vector<16x1xf32>
    %23 = vector.broadcast %22 : vector<16x1xf32> to vector<16x32xf32>
    %24 = arith.mulf %14, %23 : vector<16x32xf32>
    %25 = vector.broadcast %6 : vector<1x32xf32> to vector<16x32xf32>
    %26 = arith.mulf %24, %25 : vector<16x32xf32>
    %27 = vector.broadcast %8 : vector<1x32xf32> to vector<16x32xf32>
    %28 = arith.addf %26, %27 : vector<16x32xf32>
    %29 = arith.truncf %28 : vector<16x32xf32> to vector<16x32xbf16>
    %c0_13 = arith.constant 0 : index
    %c0_14 = arith.constant 0 : index
    %c0_15 = arith.constant 0 : index
    %30 = vector.load %arg4[%c0_13, %c0_14, %c0_15] : memref<1x32x96xbf16, #tpu.memory_space<vmem>>, vector<1x32x96xbf16>
    %31 = vector.shape_cast %30 : vector<1x32x96xbf16> to vector<32x96xbf16>
    %cst_16 = arith.constant dense<0.000000e+00> : vector<16x96xf32>
    %32 = tpu.matmul %29, %31, %cst_16 {dimension_numbers = #tpu.dot_dimension_numbers<[1], [0], [0], [1], [0, 0, 1, 1], [], []>} : vector<16x32xbf16>, vector<32x96xbf16>, vector<16x96xf32> -> vector<16x96xf32>
    %c0_17 = arith.constant 0 : index
    %c0_18 = arith.constant 0 : index
    %c0_19 = arith.constant 0 : index
    %33 = vector.load %arg5[%c0_17, %c0_18, %c0_19] : memref<1x1x96xf32, #tpu.memory_space<vmem>>, vector<1x1x96xf32>
    %34 = vector.shape_cast %33 : vector<1x1x96xf32> to vector<1x96xf32>
    %35 = vector.broadcast %34 : vector<1x96xf32> to vector<16x96xf32>
    %36 = arith.addf %32, %35 : vector<16x96xf32>
    %37 = vector.extract_strided_slice %36 {offsets = [0, 0], sizes = [16, 32], strides = [1, 1]} : vector<16x96xf32> to vector<16x32xf32>
    %38 = vector.shape_cast %37 : vector<16x32xf32> to vector<2x8x4x8xf32>
    %39 = tpu.transpose %38, [0, 2, 1, 3] : vector<2x8x4x8xf32> -> vector<2x4x8x8xf32>
    %40 = vector.shape_cast %39 : vector<2x4x8x8xf32> to vector<8x8x8xf32>
    %41 = arith.truncf %40 : vector<8x8x8xf32> to vector<8x8x8xbf16>
    %42 = vector.extract_strided_slice %36 {offsets = [0, 32], sizes = [16, 32], strides = [1, 1]} : vector<16x96xf32> to vector<16x32xf32>
    %43 = vector.shape_cast %42 : vector<16x32xf32> to vector<2x8x4x8xf32>
    %44 = tpu.transpose %43, [0, 2, 1, 3] : vector<2x8x4x8xf32> -> vector<2x4x8x8xf32>
    %45 = vector.shape_cast %44 : vector<2x4x8x8xf32> to vector<8x8x8xf32>
    %46 = arith.truncf %45 : vector<8x8x8xf32> to vector<8x8x8xbf16>
    %47 = vector.extract_strided_slice %36 {offsets = [0, 64], sizes = [16, 32], strides = [1, 1]} : vector<16x96xf32> to vector<16x32xf32>
    %48 = vector.shape_cast %47 : vector<16x32xf32> to vector<2x8x4x8xf32>
    %49 = tpu.transpose %48, [0, 2, 1, 3] : vector<2x8x4x8xf32> -> vector<2x4x8x8xf32>
    %50 = vector.shape_cast %49 : vector<2x4x8x8xf32> to vector<8x8x8xf32>
    %51 = arith.truncf %50 : vector<8x8x8xf32> to vector<8x8x8xbf16>
    %52 = tpu.iota {dimensions = array<i32: 0>} : vector<8x8xi32>
    %c0_i32_20 = arith.constant 0 : i32
    %53 = vector.broadcast %c0_i32_20 : i32 to vector<8x8xi32>
    %54 = arith.addi %52, %53 : vector<8x8xi32>
    %55 = tpu.iota {dimensions = array<i32: 1>} : vector<8x8xi32>
    %56 = arith.cmpi sge, %54, %55 : vector<8x8xi32>
    %cst_21 = arith.constant 0.000000e+00 : f32
    %cst_22 = arith.constant -1.000000e+30 : f32
    %57 = vector.broadcast %cst_21 : f32 to vector<8x8xf32>
    %58 = vector.broadcast %cst_22 : f32 to vector<8x8xf32>
    %59 = arith.select %56, %57, %58 : vector<8x8xi1>, vector<8x8xf32>
    "tpu.trace_start"() <{level = 10 : i32, message = "ntd,nsd->nts"}> : () -> ()
    %cst_23 = arith.constant dense<0.000000e+00> : vector<8x8x8xf32>
    %60 = tpu.matmul %41, %46, %cst_23 {dimension_numbers = #tpu.dot_dimension_numbers<[2], [2], [1], [1], [0, 0, 0, 1, 1, 1], [0], [0]>} : vector<8x8x8xbf16>, vector<8x8x8xbf16>, vector<8x8x8xf32> -> vector<8x8x8xf32>
    "tpu.trace_stop"() : () -> ()
    %61 = vector.shape_cast %59 : vector<8x8xf32> to vector<1x8x8xf32>
    %62 = vector.broadcast %61 : vector<1x8x8xf32> to vector<8x8x8xf32>
    %63 = arith.addf %60, %62 : vector<8x8x8xf32>
    %cst_24 = arith.constant dense<0xFF800000> : vector<8x8xf32>
    %64 = vector.multi_reduction <maximumf>, %63, %cst_24 [2] : vector<8x8x8xf32> to vector<8x8xf32>
    %65 = vector.shape_cast %64 : vector<8x8xf32> to vector<8x8x1xf32>
    %66 = vector.broadcast %65 : vector<8x8x1xf32> to vector<8x8x8xf32>
    %67 = arith.subf %63, %66 : vector<8x8x8xf32>
    %68 = math.exp %67 : vector<8x8x8xf32>
    %cst_25 = arith.constant dense<0.000000e+00> : vector<8x8xf32>
    %69 = vector.multi_reduction <add>, %68, %cst_25 [2] : vector<8x8x8xf32> to vector<8x8xf32>
    %70 = vector.shape_cast %69 : vector<8x8xf32> to vector<8x8x1xf32>
    %71 = arith.truncf %68 : vector<8x8x8xf32> to vector<8x8x8xbf16>
    "tpu.trace_start"() <{level = 10 : i32, message = "nts,nsd->ntd"}> : () -> ()
    %cst_26 = arith.constant dense<0.000000e+00> : vector<8x8x8xf32>
    %72 = tpu.matmul %71, %51, %cst_26 {dimension_numbers = #tpu.dot_dimension_numbers<[2], [1], [1], [2], [0, 0, 0, 1, 1, 2], [0], [0]>} : vector<8x8x8xbf16>, vector<8x8x8xbf16>, vector<8x8x8xf32> -> vector<8x8x8xf32>
    "tpu.trace_stop"() : () -> ()
    %73 = tpu.reciprocal %70 {approx = true} : vector<8x8x1xf32> -> vector<8x8x1xf32>
    %74 = vector.broadcast %73 : vector<8x8x1xf32> to vector<8x8x8xf32>
    %75 = arith.mulf %72, %74 : vector<8x8x8xf32>
    %76 = vector.shape_cast %75 : vector<8x8x8xf32> to vector<2x4x8x8xf32>
    %77 = tpu.transpose %76, [0, 2, 1, 3] : vector<2x4x8x8xf32> -> vector<2x8x4x8xf32>
    %78 = vector.shape_cast %77 : vector<2x8x4x8xf32> to vector<16x32xf32>
    %79 = arith.truncf %78 : vector<16x32xf32> to vector<16x32xbf16>
    %c0_27 = arith.constant 0 : index
    %c0_28 = arith.constant 0 : index
    %c0_29 = arith.constant 0 : index
    %80 = vector.load %arg6[%c0_27, %c0_28, %c0_29] : memref<1x32x32xbf16, #tpu.memory_space<vmem>>, vector<1x32x32xbf16>
    %81 = vector.shape_cast %80 : vector<1x32x32xbf16> to vector<32x32xbf16>
    %cst_30 = arith.constant dense<0.000000e+00> : vector<16x32xf32>
    %82 = tpu.matmul %79, %81, %cst_30 {dimension_numbers = #tpu.dot_dimension_numbers<[1], [0], [0], [1], [0, 0, 1, 1], [], []>} : vector<16x32xbf16>, vector<32x32xbf16>, vector<16x32xf32> -> vector<16x32xf32>
    %c0_31 = arith.constant 0 : index
    %c0_32 = arith.constant 0 : index
    %c0_33 = arith.constant 0 : index
    %83 = vector.load %arg7[%c0_31, %c0_32, %c0_33] : memref<1x1x32xf32, #tpu.memory_space<vmem>>, vector<1x1x32xf32>
    %84 = vector.shape_cast %83 : vector<1x1x32xf32> to vector<1x32xf32>
    %85 = vector.broadcast %84 : vector<1x32xf32> to vector<16x32xf32>
    %86 = arith.addf %82, %85 : vector<16x32xf32>
    %87 = arith.addf %4, %86 : vector<16x32xf32>
    %c0_34 = arith.constant 0 : index
    %c0_35 = arith.constant 0 : index
    %c0_36 = arith.constant 0 : index
    %88 = vector.load %arg8[%c0_34, %c0_35, %c0_36] : memref<1x1x32xf32, #tpu.memory_space<vmem>>, vector<1x1x32xf32>
    %89 = vector.shape_cast %88 : vector<1x1x32xf32> to vector<1x32xf32>
    %c0_37 = arith.constant 0 : index
    %c0_38 = arith.constant 0 : index
    %c0_39 = arith.constant 0 : index
    %90 = vector.load %arg9[%c0_37, %c0_38, %c0_39] : memref<1x1x32xf32, #tpu.memory_space<vmem>>, vector<1x1x32xf32>
    %91 = vector.shape_cast %90 : vector<1x1x32xf32> to vector<1x32xf32>
    %cst_40 = arith.constant dense<0.000000e+00> : vector<16xf32>
    %92 = vector.multi_reduction <add>, %87, %cst_40 [1] : vector<16x32xf32> to vector<16xf32>
    %93 = vector.shape_cast %92 : vector<16xf32> to vector<16x1xf32>
    %cst_41 = arith.constant 3.200000e+01 : f32
    %94 = vector.broadcast %cst_41 : f32 to vector<16x1xf32>
    %95 = arith.divf %93, %94 : vector<16x1xf32>
    %96 = vector.broadcast %95 : vector<16x1xf32> to vector<16x32xf32>
    %97 = arith.subf %87, %96 : vector<16x32xf32>
    %98 = arith.mulf %97, %97 : vector<16x32xf32>
    %cst_42 = arith.constant dense<0.000000e+00> : vector<16xf32>
    %99 = vector.multi_reduction <add>, %98, %cst_42 [1] : vector<16x32xf32> to vector<16xf32>
    %100 = vector.shape_cast %99 : vector<16xf32> to vector<16x1xf32>
    %cst_43 = arith.constant 3.200000e+01 : f32
    %101 = vector.broadcast %cst_43 : f32 to vector<16x1xf32>
    %102 = arith.divf %100, %101 : vector<16x1xf32>
    %cst_44 = arith.constant 9.99999974E-6 : f32
    %103 = vector.broadcast %cst_44 : f32 to vector<16x1xf32>
    %104 = arith.addf %102, %103 : vector<16x1xf32>
    %105 = math.rsqrt %104 : vector<16x1xf32>
    %106 = vector.broadcast %105 : vector<16x1xf32> to vector<16x32xf32>
    %107 = arith.mulf %97, %106 : vector<16x32xf32>
    %108 = vector.broadcast %89 : vector<1x32xf32> to vector<16x32xf32>
    %109 = arith.mulf %107, %108 : vector<16x32xf32>
    %110 = vector.broadcast %91 : vector<1x32xf32> to vector<16x32xf32>
    %111 = arith.addf %109, %110 : vector<16x32xf32>
    %112 = arith.truncf %111 : vector<16x32xf32> to vector<16x32xbf16>
    %c0_45 = arith.constant 0 : index
    %c0_46 = arith.constant 0 : index
    %c0_47 = arith.constant 0 : index
    %113 = vector.load %arg10[%c0_45, %c0_46, %c0_47] : memref<1x32x128xbf16, #tpu.memory_space<vmem>>, vector<1x32x128xbf16>
    %114 = vector.shape_cast %113 : vector<1x32x128xbf16> to vector<32x128xbf16>
    %cst_48 = arith.constant dense<0.000000e+00> : vector<16x128xf32>
    %115 = tpu.matmul %112, %114, %cst_48 {dimension_numbers = #tpu.dot_dimension_numbers<[1], [0], [0], [1], [0, 0, 1, 1], [], []>} : vector<16x32xbf16>, vector<32x128xbf16>, vector<16x128xf32> -> vector<16x128xf32>
    %c0_49 = arith.constant 0 : index
    %c0_50 = arith.constant 0 : index
    %c0_51 = arith.constant 0 : index
    %116 = vector.load %arg11[%c0_49, %c0_50, %c0_51] : memref<1x1x128xf32, #tpu.memory_space<vmem>>, vector<1x1x128xf32>
    %117 = vector.shape_cast %116 : vector<1x1x128xf32> to vector<1x128xf32>
    %118 = vector.broadcast %117 : vector<1x128xf32> to vector<16x128xf32>
    %119 = arith.addf %115, %118 : vector<16x128xf32>
    %cst_52 = arith.constant 5.000000e-01 : f32
    %120 = vector.broadcast %cst_52 : f32 to vector<16x128xf32>
    %121 = arith.mulf %120, %119 : vector<16x128xf32>
    %cst_53 = arith.constant 0.707106769 : f32
    %122 = vector.broadcast %cst_53 : f32 to vector<16x128xf32>
    %123 = arith.mulf %119, %122 : vector<16x128xf32>
    %cst_54 = arith.constant 0.000000e+00 : f32
    %124 = vector.broadcast %cst_54 : f32 to vector<16x128xf32>
    %125 = arith.cmpf oge, %123, %124 : vector<16x128xf32>
    %cst_55 = arith.constant 1.000000e+00 : f32
    %cst_56 = arith.constant -1.000000e+00 : f32
    %126 = vector.broadcast %cst_55 : f32 to vector<16x128xf32>
    %127 = vector.broadcast %cst_56 : f32 to vector<16x128xf32>
    %128 = arith.select %125, %126, %127 : vector<16x128xi1>, vector<16x128xf32>
    %129 = math.absf %123 : vector<16x128xf32>
    %cst_57 = arith.constant 0.327591091 : f32
    %130 = vector.broadcast %cst_57 : f32 to vector<16x128xf32>
    %131 = arith.mulf %130, %129 : vector<16x128xf32>
    %cst_58 = arith.constant 1.000000e+00 : f32
    %132 = vector.broadcast %cst_58 : f32 to vector<16x128xf32>
    %133 = arith.addf %132, %131 : vector<16x128xf32>
    %134 = tpu.reciprocal %133 {approx = true} : vector<16x128xf32> -> vector<16x128xf32>
    %cst_59 = arith.constant 1.06140542 : f32
    %135 = vector.broadcast %cst_59 : f32 to vector<16x128xf32>
    %136 = arith.mulf %135, %134 : vector<16x128xf32>
    %cst_60 = arith.constant -1.45315206 : f32
    %137 = vector.broadcast %cst_60 : f32 to vector<16x128xf32>
    %138 = arith.addf %136, %137 : vector<16x128xf32>
    %139 = arith.mulf %138, %134 : vector<16x128xf32>
    %cst_61 = arith.constant 1.42141378 : f32
    %140 = vector.broadcast %cst_61 : f32 to vector<16x128xf32>
    %141 = arith.addf %139, %140 : vector<16x128xf32>
    %142 = arith.mulf %141, %134 : vector<16x128xf32>
    %cst_62 = arith.constant -0.284496725 : f32
    %143 = vector.broadcast %cst_62 : f32 to vector<16x128xf32>
    %144 = arith.addf %142, %143 : vector<16x128xf32>
    %145 = arith.mulf %144, %134 : vector<16x128xf32>
    %cst_63 = arith.constant 0.254829586 : f32
    %146 = vector.broadcast %cst_63 : f32 to vector<16x128xf32>
    %147 = arith.addf %145, %146 : vector<16x128xf32>
    %148 = arith.mulf %147, %134 : vector<16x128xf32>
    %cst_64 = arith.constant 0.000000e+00 : f32
    %149 = vector.broadcast %cst_64 : f32 to vector<16x128xf32>
    %150 = arith.subf %149, %129 : vector<16x128xf32>
    %151 = arith.mulf %150, %129 : vector<16x128xf32>
    %152 = math.exp %151 : vector<16x128xf32>
    %153 = arith.mulf %148, %152 : vector<16x128xf32>
    %cst_65 = arith.constant 1.000000e+00 : f32
    %154 = vector.broadcast %cst_65 : f32 to vector<16x128xf32>
    %155 = arith.subf %154, %153 : vector<16x128xf32>
    %156 = arith.mulf %128, %155 : vector<16x128xf32>
    %cst_66 = arith.constant 1.000000e+00 : f32
    %157 = vector.broadcast %cst_66 : f32 to vector<16x128xf32>
    %158 = arith.addf %157, %156 : vector<16x128xf32>
    %159 = arith.mulf %121, %158 : vector<16x128xf32>
    %160 = arith.truncf %159 : vector<16x128xf32> to vector<16x128xbf16>
    %c0_67 = arith.constant 0 : index
    %c0_68 = arith.constant 0 : index
    %c0_69 = arith.constant 0 : index
    %161 = vector.load %arg12[%c0_67, %c0_68, %c0_69] : memref<1x128x32xbf16, #tpu.memory_space<vmem>>, vector<1x128x32xbf16>
    %162 = vector.shape_cast %161 : vector<1x128x32xbf16> to vector<128x32xbf16>
    %cst_70 = arith.constant dense<0.000000e+00> : vector<16x32xf32>
    %163 = tpu.matmul %160, %162, %cst_70 {dimension_numbers = #tpu.dot_dimension_numbers<[1], [0], [0], [1], [0, 0, 1, 1], [], []>} : vector<16x128xbf16>, vector<128x32xbf16>, vector<16x32xf32> -> vector<16x32xf32>
    %c0_71 = arith.constant 0 : index
    %c0_72 = arith.constant 0 : index
    %c0_73 = arith.constant 0 : index
    %164 = vector.load %arg13[%c0_71, %c0_72, %c0_73] : memref<1x1x32xf32, #tpu.memory_space<vmem>>, vector<1x1x32xf32>
    %165 = vector.shape_cast %164 : vector<1x1x32xf32> to vector<1x32xf32>
    %166 = vector.broadcast %165 : vector<1x32xf32> to vector<16x32xf32>
    %167 = arith.addf %163, %166 : vector<16x32xf32>
    %168 = arith.addf %87, %167 : vector<16x32xf32>
    %169 = vector.shape_cast %168 : vector<16x32xf32> to vector<2x8x32xf32>
    %c0_74 = arith.constant 0 : index
    %c0_75 = arith.constant 0 : index
    %c0_76 = arith.constant 0 : index
    %170 = vector.load %arg17[%c0_74, %c0_75, %c0_76] : memref<2x8x32xf32, #tpu.memory_space<vmem>>, vector<2x8x32xf32>
    tpu.vector_store %arg17[%c0_74, %c0_75, %c0_76], %169 {strides = array<i32>} : memref<2x8x32xf32, #tpu.memory_space<vmem>>, vector<2x8x32xf32>,
    %171 = vector.extract_strided_slice %169 {offsets = [0, 7, 0], sizes = [2, 1, 32], strides = [1, 1, 1]} : vector<2x8x32xf32> to vector<2x1x32xf32>
    %172 = vector.shape_cast %171 : vector<2x1x32xf32> to vector<2x32xf32>
    %c0_77 = arith.constant 0 : index
    %c0_78 = arith.constant 0 : index
    %173 = vector.load %arg14[%c0_77, %c0_78] : memref<1x32xf32, #tpu.memory_space<vmem>>, vector<1x32xf32>
    %c0_79 = arith.constant 0 : index
    %c0_80 = arith.constant 0 : index
    %174 = vector.load %arg15[%c0_79, %c0_80] : memref<1x32xf32, #tpu.memory_space<vmem>>, vector<1x32xf32>
    %cst_81 = arith.constant dense<0.000000e+00> : vector<2xf32>
    %175 = vector.multi_reduction <add>, %172, %cst_81 [1] : vector<2x32xf32> to vector<2xf32>
    %176 = vector.shape_cast %175 : vector<2xf32> to vector<2x1xf32>
    %cst_82 = arith.constant 3.200000e+01 : f32
    %177 = vector.broadcast %cst_82 : f32 to vector<2x1xf32>
    %178 = arith.divf %176, %177 : vector<2x1xf32>
    %179 = vector.broadcast %178 : vector<2x1xf32> to vector<2x32xf32>
    %180 = arith.subf %172, %179 : vector<2x32xf32>
    %181 = arith.mulf %180, %180 : vector<2x32xf32>
    %cst_83 = arith.constant dense<0.000000e+00> : vector<2xf32>
    %182 = vector.multi_reduction <add>, %181, %cst_83 [1] : vector<2x32xf32> to vector<2xf32>
    %183 = vector.shape_cast %182 : vector<2xf32> to vector<2x1xf32>
    %cst_84 = arith.constant 3.200000e+01 : f32
    %184 = vector.broadcast %cst_84 : f32 to vector<2x1xf32>
    %185 = arith.divf %183, %184 : vector<2x1xf32>
    %cst_85 = arith.constant 9.99999974E-6 : f32
    %186 = vector.broadcast %cst_85 : f32 to vector<2x1xf32>
    %187 = arith.addf %185, %186 : vector<2x1xf32>
    %188 = math.rsqrt %187 : vector<2x1xf32>
    %189 = vector.broadcast %188 : vector<2x1xf32> to vector<2x32xf32>
    %190 = arith.mulf %180, %189 : vector<2x32xf32>
    %191 = vector.broadcast %173 : vector<1x32xf32> to vector<2x32xf32>
    %192 = arith.mulf %190, %191 : vector<2x32xf32>
    %193 = vector.broadcast %174 : vector<1x32xf32> to vector<2x32xf32>
    %194 = arith.addf %192, %193 : vector<2x32xf32>
    %c0_86 = arith.constant 0 : index
    %c0_87 = arith.constant 0 : index
    %195 = vector.load %arg16[%c0_86, %c0_87] : memref<2x32xf32, #tpu.memory_space<vmem>>, vector<2x32xf32>
    tpu.vector_store %arg16[%c0_86, %c0_87], %194 {strides = array<i32>} : memref<2x32xf32, #tpu.memory_space<vmem>>, vector<2x32xf32>,
    return
  }
  func.func @transform_0(%arg0: i32) -> (i32, i32, i32) {
    %c0_i32 = arith.constant 0 : i32
    %c0_i32_0 = arith.constant 0 : i32
    %c0_i32_1 = arith.constant 0 : i32
    %c0_i32_2 = arith.constant 0 : i32
    return %c0_i32, %c0_i32_0, %c0_i32_1 : i32, i32, i32
  }
  func.func @transform_1(%arg0: i32) -> (i32, i32, i32) {
    %c0_i32 = arith.constant 0 : i32
    %c0_i32_0 = arith.constant 0 : i32
    %c0_i32_1 = arith.constant 0 : i32
    return %arg0, %c0_i32, %c0_i32_0 : i32, i32, i32
  }
  func.func @transform_2(%arg0: i32) -> (i32, i32, i32) {
    %c0_i32 = arith.constant 0 : i32
    %c0_i32_0 = arith.constant 0 : i32
    %c0_i32_1 = arith.constant 0 : i32
    return %arg0, %c0_i32, %c0_i32_0 : i32, i32, i32
  }
  func.func @transform_3(%arg0: i32) -> (i32, i32, i32) {
    %c0_i32 = arith.constant 0 : i32
    %c0_i32_0 = arith.constant 0 : i32
    %c0_i32_1 = arith.constant 0 : i32
    return %arg0, %c0_i32, %c0_i32_0 : i32, i32, i32
  }
  func.func @transform_4(%arg0: i32) -> (i32, i32, i32) {
    %c0_i32 = arith.constant 0 : i32
    %c0_i32_0 = arith.constant 0 : i32
    %c0_i32_1 = arith.constant 0 : i32
    return %arg0, %c0_i32, %c0_i32_0 : i32, i32, i32
  }
  func.func @transform_5(%arg0: i32) -> (i32, i32, i32) {
    %c0_i32 = arith.constant 0 : i32
    %c0_i32_0 = arith.constant 0 : i32
    %c0_i32_1 = arith.constant 0 : i32
    return %arg0, %c0_i32, %c0_i32_0 : i32, i32, i32
  }
  func.func @transform_6(%arg0: i32) -> (i32, i32, i32) {
    %c0_i32 = arith.constant 0 : i32
    %c0_i32_0 = arith.constant 0 : i32
    %c0_i32_1 = arith.constant 0 : i32
    return %arg0, %c0_i32, %c0_i32_0 : i32, i32, i32
  }
  func.func @transform_7(%arg0: i32) -> (i32, i32, i32) {
    %c0_i32 = arith.constant 0 : i32
    %c0_i32_0 = arith.constant 0 : i32
    %c0_i32_1 = arith.constant 0 : i32
    return %arg0, %c0_i32, %c0_i32_0 : i32, i32, i32
  }
  func.func @transform_8(%arg0: i32) -> (i32, i32, i32) {
    %c0_i32 = arith.constant 0 : i32
    %c0_i32_0 = arith.constant 0 : i32
    %c0_i32_1 = arith.constant 0 : i32
    return %arg0, %c0_i32, %c0_i32_0 : i32, i32, i32
  }
  func.func @transform_9(%arg0: i32) -> (i32, i32, i32) {
    %c0_i32 = arith.constant 0 : i32
    %c0_i32_0 = arith.constant 0 : i32
    %c0_i32_1 = arith.constant 0 : i32
    return %arg0, %c0_i32, %c0_i32_0 : i32, i32, i32
  }
  func.func @transform_10(%arg0: i32) -> (i32, i32, i32) {
    %c0_i32 = arith.constant 0 : i32
    %c0_i32_0 = arith.constant 0 : i32
    %c0_i32_1 = arith.constant 0 : i32
    return %arg0, %c0_i32, %c0_i32_0 : i32, i32, i32
  }
  func.func @transform_11(%arg0: i32) -> (i32, i32, i32) {
    %c0_i32 = arith.constant 0 : i32
    %c0_i32_0 = arith.constant 0 : i32
    %c0_i32_1 = arith.constant 0 : i32
    return %arg0, %c0_i32, %c0_i32_0 : i32, i32, i32
  }
  func.func @transform_12(%arg0: i32) -> (i32, i32, i32) {
    %c0_i32 = arith.constant 0 : i32
    %c0_i32_0 = arith.constant 0 : i32
    %c0_i32_1 = arith.constant 0 : i32
    return %arg0, %c0_i32, %c0_i32_0 : i32, i32, i32
  }
  func.func @transform_13(%arg0: i32) -> (i32, i32) {
    %c0_i32 = arith.constant 0 : i32
    %c0_i32_0 = arith.constant 0 : i32
    %c0_i32_1 = arith.constant 0 : i32
    return %c0_i32, %c0_i32_0 : i32, i32
  }
  func.func @transform_14(%arg0: i32) -> (i32, i32) {
    %c0_i32 = arith.constant 0 : i32
    %c0_i32_0 = arith.constant 0 : i32
    %c0_i32_1 = arith.constant 0 : i32
    return %c0_i32, %c0_i32_0 : i32, i32
  }
  func.func @transform_15(%arg0: i32) -> (i32, i32) {
    %c0_i32 = arith.constant 0 : i32
    %c0_i32_0 = arith.constant 0 : i32
    %c0_i32_1 = arith.constant 0 : i32
    return %c0_i32, %c0_i32_0 : i32, i32
  }
}

</mosaic_0001>

<llo_original>
// kernel: tpu_custom_call.1
$region0: #{tpu_custom_call.1}
  #allocation0 [shape = 'u32[]', space=smem, size = 0x4, offset = 0x4, fixed_abs, tag = 'smem constant byte address 0x4 - core index']
  #allocation1 [shape = 'u32[72,128]{1,0:T(1,128)}', space=vmem, size = 0x9000, scoped, tag = 'internal scratch']
  #allocation2 [shape = 'f32[2,8,32]{2,1,0:T(8,128)}', space=vmem, size = 0x2000, scoped, tag = 'scratch operand']
  %s0 = inlined_call_operand.vmem [shape: f32[2,8,32], index: 0, kind: input, shape index: {}]
  %s1 = inlined_call_operand.vmem [shape: f32[2,1,32], index: 1, kind: input, shape index: {}]
  %s2 = inlined_call_operand.vmem [shape: f32[2,1,32], index: 2, kind: input, shape index: {}]
  %s3 = inlined_call_operand.vmem [shape: bf16[2,32,96], index: 3, kind: input, shape index: {}]
  %s4 = inlined_call_operand.vmem [shape: f32[2,1,96], index: 4, kind: input, shape index: {}]
  %s5 = inlined_call_operand.vmem [shape: bf16[2,32,32], index: 5, kind: input, shape index: {}]
  %s6 = inlined_call_operand.vmem [shape: f32[2,1,32], index: 6, kind: input, shape index: {}]
  %s7 = inlined_call_operand.vmem [shape: f32[2,1,32], index: 7, kind: input, shape index: {}]
  %s8 = inlined_call_operand.vmem [shape: f32[2,1,32], index: 8, kind: input, shape index: {}]
  %s9 = inlined_call_operand.vmem [shape: bf16[2,32,128], index: 9, kind: input, shape index: {}]
  %s10 = inlined_call_operand.vmem [shape: f32[2,1,128], index: 10, kind: input, shape index: {}]
  %s11 = inlined_call_operand.vmem [shape: bf16[2,128,32], index: 11, kind: input, shape index: {}]
  %s12 = inlined_call_operand.vmem [shape: f32[2,1,32], index: 12, kind: input, shape index: {}]
  %s13 = inlined_call_operand.vmem [shape: f32[1,32], index: 13, kind: input, shape index: {}]
  %s14 = inlined_call_operand.vmem [shape: f32[1,32], index: 14, kind: input, shape index: {}]
  %s15 = inlined_call_operand.hbm [shape: f32[2,32], index: 15, kind: output, shape index: {}]
  %s16 = sld [smem:[#allocation0]]
  $region97: #{tpu_custom_call.1} parent=0
    _
  %s18 = ssub.s32 1, %s16
  %s19 = scalar_select 0, %s18, %s16
  $region1: #{tpu_custom_call.1} parent=0
    #allocation3 [shape = 'u8[1024]{0}', space=vmem, size = 0x400, scoped, tag = 'output window, operand 0, single buffered']
    #allocation4 [shape = 's32[2]{0}', space=sflag, size = 0x8, scoped, tag = 'scoped memory for tpu_custom_call.1']
    %20 = vsyncpa [#allocation4], 0
    loop: start=0, step=1, limit=4
    $region2: #{tpu_custom_call.1} parent=1 // loop_pre_header
      _
    $region3: #{tpu_custom_call.1} parent=1 // loop_header
      %s22 = sphi 0, %s26
      %p23 = scmp.ge.s32.totalorder %s22, 4
      %s30 = sphi 0, %s30
      %s32 = sphi 0, %s30
      %s33 = sphi 0, %s32
      %s47 = sphi 0, %s33
      %s53 = sphi 0, %s55
      %s56 = sphi 0, %s53
      %s57 = sphi 0, %s56
      %s73 = sphi 0, %s57
      %s79 = sphi 0, %s81
      %s82 = sphi 0, %s79
      %s83 = sphi 0, %s82
      %s99 = sphi 0, %s83
      %s105 = sphi 0, %s107
      %s108 = sphi 0, %s105
      %s109 = sphi 0, %s108
      %s125 = sphi 0, %s109
      %s131 = sphi 0, %s133
      %s134 = sphi 0, %s131
      %s135 = sphi 0, %s134
      %s151 = sphi 0, %s135
      %s157 = sphi 0, %s159
      %s160 = sphi 0, %s157
      %s161 = sphi 0, %s160
      %s177 = sphi 0, %s161
      %s183 = sphi 0, %s185
      %s186 = sphi 0, %s183
      %s187 = sphi 0, %s186
      %s203 = sphi 0, %s187
      %s209 = sphi 0, %s211
      %s212 = sphi 0, %s209
      %s213 = sphi 0, %s212
      %s229 = sphi 0, %s213
      %s235 = sphi 0, %s237
      %s238 = sphi 0, %s235
      %s239 = sphi 0, %s238
      %s255 = sphi 0, %s239
      %s261 = sphi 0, %s263
      %s264 = sphi 0, %s261
      %s265 = sphi 0, %s264
      %s281 = sphi 0, %s265
      %s287 = sphi 0, %s289
      %s290 = sphi 0, %s287
      %s291 = sphi 0, %s290
      %s307 = sphi 0, %s291
      %s313 = sphi 0, %s315
      %s316 = sphi 0, %s313
      %s317 = sphi 0, %s316
      %s333 = sphi 0, %s317
      %s339 = sphi 0, %s341
      %s342 = sphi 0, %s339
      %s343 = sphi 0, %s342
      %s359 = sphi 0, %s343
      %s363 = sphi 0, %s363
      %s365 = sphi 0, %s363
      %s366 = sphi 0, %s365
      %s380 = sphi 0, %s366
      %s384 = sphi 0, %s384
      %s386 = sphi 0, %s384
      %s387 = sphi 0, %s386
      %s401 = sphi 0, %s387
      %s405 = sphi 0, %s405
      %s407 = sphi 0, %s405
      %s408 = sphi 0, %s407
      %s422 = sphi 0, %s408
    $region4: #{tpu_custom_call.1} parent=1 // loop_header_branch
      %25 = sbr.rel (%p23) target = $region8
    $region5: #{tpu_custom_call.1} parent=1 // loop_body
      %s27 = ssub.s32 %s22, 1
      %s28 = ssub.s32 %s22, 2
      %s29 = sadd.s32 %s22, 1
      %s31 = sadd.s32 %s30, 1
      %p34 = scmp.eq.s32.totalorder %s22, 1
      %p35 = scmp.ne.s32.totalorder %s30, %s32
      %p36 = scmp.eq.s32.totalorder %s22, 0
      %p37 = por %p35, %p36
      %p38 = scmp.ne.s32.totalorder %s30, %s32
      %p39 = scmp.eq.s32.totalorder %s27, 1
      %p40 = por %p38, %p39
      %p41 = scmp.ne.s32.totalorder %s32, %s33
      %p42 = scmp.eq.s32.totalorder %s27, 0
      %p43 = por %p41, %p42
      %p44 = scmp.ne.s32.totalorder %s32, %s33
      %p45 = scmp.eq.s32.totalorder %s28, 1
      %p46 = por %p44, %p45
      %p48 = scmp.ne.s32.totalorder %s33, %s47
      %p49 = scmp.eq.s32.totalorder %s28, 0
      %p50 = por %p48, %p49
      %s51 = ssub.s32 %s22, %s29
      %p52 = scmp.eq.s32.totalorder %s51, 0
      %s54 = sadd.s32 %s53, 1
      %s55 = scalar_select %p52, %s53, %s54
      %p58 = pneg %p52
      %p59 = scmp.eq.s32.totalorder %s22, 1
      %p60 = por %p58, %p59
      %p61 = scmp.ne.s32.totalorder %s53, %s56
      %p62 = scmp.eq.s32.totalorder %s22, 0
      %p63 = por %p61, %p62
      %p64 = scmp.ne.s32.totalorder %s53, %s56
      %p65 = scmp.eq.s32.totalorder %s27, 1
      %p66 = por %p64, %p65
      %p67 = scmp.ne.s32.totalorder %s56, %s57
      %p68 = scmp.eq.s32.totalorder %s27, 0
      %p69 = por %p67, %p68
      %p70 = scmp.ne.s32.totalorder %s56, %s57
      %p71 = scmp.eq.s32.totalorder %s28, 1
      %p72 = por %p70, %p71
      %p74 = scmp.ne.s32.totalorder %s57, %s73
      %p75 = scmp.eq.s32.totalorder %s28, 0
      %p76 = por %p74, %p75
      %s77 = ssub.s32 %s22, %s29
      %p78 = scmp.eq.s32.totalorder %s77, 0
      %s80 = sadd.s32 %s79, 1
      %s81 = scalar_select %p78, %s79, %s80
      %p84 = pneg %p78
      %p85 = scmp.eq.s32.totalorder %s22, 1
      %p86 = por %p84, %p85
      %p87 = scmp.ne.s32.totalorder %s79, %s82
      %p88 = scmp.eq.s32.totalorder %s22, 0
      %p89 = por %p87, %p88
      %p90 = scmp.ne.s32.totalorder %s79, %s82
      %p91 = scmp.eq.s32.totalorder %s27, 1
      %p92 = por %p90, %p91
      %p93 = scmp.ne.s32.totalorder %s82, %s83
      %p94 = scmp.eq.s32.totalorder %s27, 0
      %p95 = por %p93, %p94
      %p96 = scmp.ne.s32.totalorder %s82, %s83
      %p97 = scmp.eq.s32.totalorder %s28, 1
      %p98 = por %p96, %p97
      %p100 = scmp.ne.s32.totalorder %s83, %s99
      %p101 = scmp.eq.s32.totalorder %s28, 0
      %p102 = por %p100, %p101
      %s103 = ssub.s32 %s22, %s29
      %p104 = scmp.eq.s32.totalorder %s103, 0
      %s106 = sadd.s32 %s105, 1
      %s107 = scalar_select %p104, %s105, %s106
      %p110 = pneg %p104
      %p111 = scmp.eq.s32.totalorder %s22, 1
      %p112 = por %p110, %p111
      %p113 = scmp.ne.s32.totalorder %s105, %s108
      %p114 = scmp.eq.s32.totalorder %s22, 0
      %p115 = por %p113, %p114
      %p116 = scmp.ne.s32.totalorder %s105, %s108
      %p117 = scmp.eq.s32.totalorder %s27, 1
      %p118 = por %p116, %p117
      %p119 = scmp.ne.s32.totalorder %s108, %s109
      %p120 = scmp.eq.s32.totalorder %s27, 0
      %p121 = por %p119, %p120
      %p122 = scmp.ne.s32.totalorder %s108, %s109
      %p123 = scmp.eq.s32.totalorder %s28, 1
      %p124 = por %p122, %p123
      %p126 = scmp.ne.s32.totalorder %s109, %s125
      %p127 = scmp.eq.s32.totalorder %s28, 0
      %p128 = por %p126, %p127
      %s129 = ssub.s32 %s22, %s29
      %p130 = scmp.eq.s32.totalorder %s129, 0
      %s132 = sadd.s32 %s131, 1
      %s133 = scalar_select %p130, %s131, %s132
      %p136 = pneg %p130
      %p137 = scmp.eq.s32.totalorder %s22, 1
      %p138 = por %p136, %p137
      %p139 = scmp.ne.s32.totalorder %s131, %s134
      %p140 = scmp.eq.s32.totalorder %s22, 0
      %p141 = por %p139, %p140
      %p142 = scmp.ne.s32.totalorder %s131, %s134
      %p143 = scmp.eq.s32.totalorder %s27, 1
      %p144 = por %p142, %p143
      %p145 = scmp.ne.s32.totalorder %s134, %s135
      %p146 = scmp.eq.s32.totalorder %s27, 0
      %p147 = por %p145, %p146
      %p148 = scmp.ne.s32.totalorder %s134, %s135
      %p149 = scmp.eq.s32.totalorder %s28, 1
      %p150 = por %p148, %p149
      %p152 = scmp.ne.s32.totalorder %s135, %s151
      %p153 = scmp.eq.s32.totalorder %s28, 0
      %p154 = por %p152, %p153
      %s155 = ssub.s32 %s22, %s29
      %p156 = scmp.eq.s32.totalorder %s155, 0
      %s158 = sadd.s32 %s157, 1
      %s159 = scalar_select %p156, %s157, %s158
      %p162 = pneg %p156
      %p163 = scmp.eq.s32.totalorder %s22, 1
      %p164 = por %p162, %p163
      %p165 = scmp.ne.s32.totalorder %s157, %s160
      %p166 = scmp.eq.s32.totalorder %s22, 0
      %p167 = por %p165, %p166
      %p168 = scmp.ne.s32.totalorder %s157, %s160
      %p169 = scmp.eq.s32.totalorder %s27, 1
      %p170 = por %p168, %p169
      %p171 = scmp.ne.s32.totalorder %s160, %s161
      %p172 = scmp.eq.s32.totalorder %s27, 0
      %p173 = por %p171, %p172
      %p174 = scmp.ne.s32.totalorder %s160, %s161
      %p175 = scmp.eq.s32.totalorder %s28, 1
      %p176 = por %p174, %p175
      %p178 = scmp.ne.s32.totalorder %s161, %s177
      %p179 = scmp.eq.s32.totalorder %s28, 0
      %p180 = por %p178, %p179
      %s181 = ssub.s32 %s22, %s29
      %p182 = scmp.eq.s32.totalorder %s181, 0
      %s184 = sadd.s32 %s183, 1
      %s185 = scalar_select %p182, %s183, %s184
      %p188 = pneg %p182
      %p189 = scmp.eq.s32.totalorder %s22, 1
      %p190 = por %p188, %p189
      %p191 = scmp.ne.s32.totalorder %s183, %s186
      %p192 = scmp.eq.s32.totalorder %s22, 0
      %p193 = por %p191, %p192
      %p194 = scmp.ne.s32.totalorder %s183, %s186
      %p195 = scmp.eq.s32.totalorder %s27, 1
      %p196 = por %p194, %p195
      %p197 = scmp.ne.s32.totalorder %s186, %s187
      %p198 = scmp.eq.s32.totalorder %s27, 0
      %p199 = por %p197, %p198
      %p200 = scmp.ne.s32.totalorder %s186, %s187
      %p201 = scmp.eq.s32.totalorder %s28, 1
      %p202 = por %p200, %p201
      %p204 = scmp.ne.s32.totalorder %s187, %s203
      %p205 = scmp.eq.s32.totalorder %s28, 0
      %p206 = por %p204, %p205
      %s207 = ssub.s32 %s22, %s29
      %p208 = scmp.eq.s32.totalorder %s207, 0
      %s210 = sadd.s32 %s209, 1
      %s211 = scalar_select %p208, %s209, %s210
      %p214 = pneg %p208
      %p215 = scmp.eq.s32.totalorder %s22, 1
      %p216 = por %p214, %p215
      %p217 = scmp.ne.s32.totalorder %s209, %s212
      %p218 = scmp.eq.s32.totalorder %s22, 0
      %p219 = por %p217, %p218
      %p220 = scmp.ne.s32.totalorder %s209, %s212
      %p221 = scmp.eq.s32.totalorder %s27, 1
      %p222 = por %p220, %p221
      %p223 = scmp.ne.s32.totalorder %s212, %s213
      %p224 = scmp.eq.s32.totalorder %s27, 0
      %p225 = por %p223, %p224
      %p226 = scmp.ne.s32.totalorder %s212, %s213
      %p227 = scmp.eq.s32.totalorder %s28, 1
      %p228 = por %p226, %p227
      %p230 = scmp.ne.s32.totalorder %s213, %s229
      %p231 = scmp.eq.s32.totalorder %s28, 0
      %p232 = por %p230, %p231
      %s233 = ssub.s32 %s22, %s29
      %p234 = scmp.eq.s32.totalorder %s233, 0
      %s236 = sadd.s32 %s235, 1
      %s237 = scalar_select %p234, %s235, %s236
      %p240 = pneg %p234
      %p241 = scmp.eq.s32.totalorder %s22, 1
      %p242 = por %p240, %p241
      %p243 = scmp.ne.s32.totalorder %s235, %s238
      %p244 = scmp.eq.s32.totalorder %s22, 0
      %p245 = por %p243, %p244
      %p246 = scmp.ne.s32.totalorder %s235, %s238
      %p247 = scmp.eq.s32.totalorder %s27, 1
      %p248 = por %p246, %p247
      %p249 = scmp.ne.s32.totalorder %s238, %s239
      %p250 = scmp.eq.s32.totalorder %s27, 0
      %p251 = por %p249, %p250
      %p252 = scmp.ne.s32.totalorder %s238, %s239
      %p253 = scmp.eq.s32.totalorder %s28, 1
      %p254 = por %p252, %p253
      %p256 = scmp.ne.s32.totalorder %s239, %s255
      %p257 = scmp.eq.s32.totalorder %s28, 0
      %p258 = por %p256, %p257
      %s259 = ssub.s32 %s22, %s29
      %p260 = scmp.eq.s32.totalorder %s259, 0
      %s262 = sadd.s32 %s261, 1
      %s263 = scalar_select %p260, %s261, %s262
      %p266 = pneg %p260
      %p267 = scmp.eq.s32.totalorder %s22, 1
      %p268 = por %p266, %p267
      %p269 = scmp.ne.s32.totalorder %s261, %s264
      %p270 = scmp.eq.s32.totalorder %s22, 0
      %p271 = por %p269, %p270
      %p272 = scmp.ne.s32.totalorder %s261, %s264
      %p273 = scmp.eq.s32.totalorder %s27, 1
      %p274 = por %p272, %p273
      %p275 = scmp.ne.s32.totalorder %s264, %s265
      %p276 = scmp.eq.s32.totalorder %s27, 0
      %p277 = por %p275, %p276
      %p278 = scmp.ne.s32.totalorder %s264, %s265
      %p279 = scmp.eq.s32.totalorder %s28, 1
      %p280 = por %p278, %p279
      %p282 = scmp.ne.s32.totalorder %s265, %s281
      %p283 = scmp.eq.s32.totalorder %s28, 0
      %p284 = por %p282, %p283
      %s285 = ssub.s32 %s22, %s29
      %p286 = scmp.eq.s32.totalorder %s285, 0
      %s288 = sadd.s32 %s287, 1
      %s289 = scalar_select %p286, %s287, %s288
      %p292 = pneg %p286
      %p293 = scmp.eq.s32.totalorder %s22, 1
      %p294 = por %p292, %p293
      %p295 = scmp.ne.s32.totalorder %s287, %s290
      %p296 = scmp.eq.s32.totalorder %s22, 0
      %p297 = por %p295, %p296
      %p298 = scmp.ne.s32.totalorder %s287, %s290
      %p299 = scmp.eq.s32.totalorder %s27, 1
      %p300 = por %p298, %p299
      %p301 = scmp.ne.s32.totalorder %s290, %s291
      %p302 = scmp.eq.s32.totalorder %s27, 0
      %p303 = por %p301, %p302
      %p304 = scmp.ne.s32.totalorder %s290, %s291
      %p305 = scmp.eq.s32.totalorder %s28, 1
      %p306 = por %p304, %p305
      %p308 = scmp.ne.s32.totalorder %s291, %s307
      %p309 = scmp.eq.s32.totalorder %s28, 0
      %p310 = por %p308, %p309
      %s311 = ssub.s32 %s22, %s29
      %p312 = scmp.eq.s32.totalorder %s311, 0
      %s314 = sadd.s32 %s313, 1
      %s315 = scalar_select %p312, %s313, %s314
      %p318 = pneg %p312
      %p319 = scmp.eq.s32.totalorder %s22, 1
      %p320 = por %p318, %p319
      %p321 = scmp.ne.s32.totalorder %s313, %s316
      %p322 = scmp.eq.s32.totalorder %s22, 0
      %p323 = por %p321, %p322
      %p324 = scmp.ne.s32.totalorder %s313, %s316
      %p325 = scmp.eq.s32.totalorder %s27, 1
      %p326 = por %p324, %p325
      %p327 = scmp.ne.s32.totalorder %s316, %s317
      %p328 = scmp.eq.s32.totalorder %s27, 0
      %p329 = por %p327, %p328
      %p330 = scmp.ne.s32.totalorder %s316, %s317
      %p331 = scmp.eq.s32.totalorder %s28, 1
      %p332 = por %p330, %p331
      %p334 = scmp.ne.s32.totalorder %s317, %s333
      %p335 = scmp.eq.s32.totalorder %s28, 0
      %p336 = por %p334, %p335
      %s337 = ssub.s32 %s22, %s29
      %p338 = scmp.eq.s32.totalorder %s337, 0
      %s340 = sadd.s32 %s339, 1
      %s341 = scalar_select %p338, %s339, %s340
      %p344 = pneg %p338
      %p345 = scmp.eq.s32.totalorder %s22, 1
      %p346 = por %p344, %p345
      %p347 = scmp.ne.s32.totalorder %s339, %s342
      %p348 = scmp.eq.s32.totalorder %s22, 0
      %p349 = por %p347, %p348
      %p350 = scmp.ne.s32.totalorder %s339, %s342
      %p351 = scmp.eq.s32.totalorder %s27, 1
      %p352 = por %p350, %p351
      %p353 = scmp.ne.s32.totalorder %s342, %s343
      %p354 = scmp.eq.s32.totalorder %s27, 0
      %p355 = por %p353, %p354
      %p356 = scmp.ne.s32.totalorder %s342, %s343
      %p357 = scmp.eq.s32.totalorder %s28, 1
      %p358 = por %p356, %p357
      %p360 = scmp.ne.s32.totalorder %s343, %s359
      %p361 = scmp.eq.s32.totalorder %s28, 0
      %p362 = por %p360, %p361
      %s364 = sadd.s32 %s363, 1
      %p367 = scmp.eq.s32.totalorder %s22, 1
      %p368 = scmp.ne.s32.totalorder %s363, %s365
      %p369 = scmp.eq.s32.totalorder %s22, 0
      %p370 = por %p368, %p369
      %p371 = scmp.ne.s32.totalorder %s363, %s365
      %p372 = scmp.eq.s32.totalorder %s27, 1
      %p373 = por %p371, %p372
      %p374 = scmp.ne.s32.totalorder %s365, %s366
      %p375 = scmp.eq.s32.totalorder %s27, 0
      %p376 = por %p374, %p375
      %p377 = scmp.ne.s32.totalorder %s365, %s366
      %p378 = scmp.eq.s32.totalorder %s28, 1
      %p379 = por %p377, %p378
      %p381 = scmp.ne.s32.totalorder %s366, %s380
      %p382 = scmp.eq.s32.totalorder %s28, 0
      %p383 = por %p381, %p382
      %s385 = sadd.s32 %s384, 1
      %p388 = scmp.eq.s32.totalorder %s22, 1
      %p389 = scmp.ne.s32.totalorder %s384, %s386
      %p390 = scmp.eq.s32.totalorder %s22, 0
      %p391 = por %p389, %p390
      %p392 = scmp.ne.s32.totalorder %s384, %s386
      %p393 = scmp.eq.s32.totalorder %s27, 1
      %p394 = por %p392, %p393
      %p395 = scmp.ne.s32.totalorder %s386, %s387
      %p396 = scmp.eq.s32.totalorder %s27, 0
      %p397 = por %p395, %p396
      %p398 = scmp.ne.s32.totalorder %s386, %s387
      %p399 = scmp.eq.s32.totalorder %s28, 1
      %p400 = por %p398, %p399
      %p402 = scmp.ne.s32.totalorder %s387, %s401
      %p403 = scmp.eq.s32.totalorder %s28, 0
      %p404 = por %p402, %p403
      %s406 = sadd.s32 %s405, 1
      %p409 = scmp.eq.s32.totalorder %s22, 1
      %p410 = scmp.ne.s32.totalorder %s405, %s407
      %p411 = scmp.eq.s32.totalorder %s22, 0
      %p412 = por %p410, %p411
      %p413 = scmp.ne.s32.totalorder %s405, %s407
      %p414 = scmp.eq.s32.totalorder %s27, 1
      %p415 = por %p413, %p414
      %p416 = scmp.ne.s32.totalorder %s407, %s408
      %p417 = scmp.eq.s32.totalorder %s27, 0
      %p418 = por %p416, %p417
      %p419 = scmp.ne.s32.totalorder %s407, %s408
      %p420 = scmp.eq.s32.totalorder %s28, 1
      %p421 = por %p419, %p420
      %p423 = scmp.ne.s32.totalorder %s408, %s422
      %p424 = scmp.eq.s32.totalorder %s28, 0
      %p425 = por %p423, %p424
      %p426 = scmp.le.s32.totalorder 1, %s22
      %p427 = scmp.lt.s32.totalorder %s22, 3
      %p428 = pnand %p426, %p427
      %p429 = pneg %p428
      // Predicated region
      $region9: #{tpu_custom_call.1} parent=5 // pred_check
        _
      $region10: #{tpu_custom_call.1} parent=5 // pred_check_branch
        %431 = sbr.rel (%p428) target = $region12
      $region11: #{tpu_custom_call.1} parent=5 // pred_region
        %s432 = ssub.s32 %s22, 1
        // Predicated region
        $region13: #{tpu_custom_call.1} parent=11 // pred_check
          %p433 = pneg %p43
        $region14: #{tpu_custom_call.1} parent=11 // pred_check_branch
          %435 = sbr.rel (%p433) target = $region16
        $region15: #{tpu_custom_call.1} parent=11 // pred_region
          _
        $region16: #{tpu_custom_call.1} parent=11 // pred_fallthru
          _
        // Predicated region
        $region17: #{tpu_custom_call.1} parent=11 // pred_check
          %p436 = pneg %p376
        $region18: #{tpu_custom_call.1} parent=11 // pred_check_branch
          %438 = sbr.rel (%p436) target = $region20
        $region19: #{tpu_custom_call.1} parent=11 // pred_region
          _
        $region20: #{tpu_custom_call.1} parent=11 // pred_fallthru
          _
        // Predicated region
        $region21: #{tpu_custom_call.1} parent=11 // pred_check
          %p439 = pneg %p397
        $region22: #{tpu_custom_call.1} parent=11 // pred_check_branch
          %441 = sbr.rel (%p439) target = $region24
        $region23: #{tpu_custom_call.1} parent=11 // pred_region
          _
        $region24: #{tpu_custom_call.1} parent=11 // pred_fallthru
          _
      $region12: #{tpu_custom_call.1} parent=5 // pred_fallthru
        _
      %p442 = scmp.lt.s32.totalorder %s22, 2
      // Predicated region
      $region25: #{tpu_custom_call.1} parent=5 // pred_check
        %p443 = pneg %p442
      $region26: #{tpu_custom_call.1} parent=5 // pred_check_branch
        %445 = sbr.rel (%p443) target = $region28
      $region27: #{tpu_custom_call.1} parent=5 // pred_region
        // Predicated region
        $region29: #{tpu_custom_call.1} parent=27 // pred_check
          %p446 = pneg %p63
        $region30: #{tpu_custom_call.1} parent=27 // pred_check_branch
          %448 = sbr.rel (%p446) target = $region32
        $region31: #{tpu_custom_call.1} parent=27 // pred_region
          %p449 = scmp.lt.s32.totalorder %s22, 1
          %s450 = scalar_select %p449, %s22, 1
          %s451 = scalar_lea.vmem %s1, %s450
        $region32: #{tpu_custom_call.1} parent=27 // pred_fallthru
          _
        // Predicated region
        $region33: #{tpu_custom_call.1} parent=27 // pred_check
          %p452 = pneg %p89
        $region34: #{tpu_custom_call.1} parent=27 // pred_check_branch
          %454 = sbr.rel (%p452) target = $region36
        $region35: #{tpu_custom_call.1} parent=27 // pred_region
          %p455 = scmp.lt.s32.totalorder %s22, 1
          %s456 = scalar_select %p455, %s22, 1
          %s457 = scalar_lea.vmem %s2, %s456
        $region36: #{tpu_custom_call.1} parent=27 // pred_fallthru
          _
        // Predicated region
        $region37: #{tpu_custom_call.1} parent=27 // pred_check
          %p458 = pneg %p115
        $region38: #{tpu_custom_call.1} parent=27 // pred_check_branch
          %460 = sbr.rel (%p458) target = $region40
        $region39: #{tpu_custom_call.1} parent=27 // pred_region
          %p461 = scmp.lt.s32.totalorder %s22, 1
          %s462 = scalar_select %p461, %s22, 1
          %s463 = smul.addr %s462, 4
          %s464 = smul.addr %s463, 4
          %s465 = scalar_lea.vmem %s3, %s464
        $region40: #{tpu_custom_call.1} parent=27 // pred_fallthru
          _
        // Predicated region
        $region41: #{tpu_custom_call.1} parent=27 // pred_check
          %p466 = pneg %p141
        $region42: #{tpu_custom_call.1} parent=27 // pred_check_branch
          %468 = sbr.rel (%p466) target = $region44
        $region43: #{tpu_custom_call.1} parent=27 // pred_region
          %p469 = scmp.lt.s32.totalorder %s22, 1
          %s470 = scalar_select %p469, %s22, 1
          %s471 = scalar_lea.vmem %s4, %s470
        $region44: #{tpu_custom_call.1} parent=27 // pred_fallthru
          _
        // Predicated region
        $region45: #{tpu_custom_call.1} parent=27 // pred_check
          %p472 = pneg %p167
        $region46: #{tpu_custom_call.1} parent=27 // pred_check_branch
          %474 = sbr.rel (%p472) target = $region48
        $region47: #{tpu_custom_call.1} parent=27 // pred_region
          %p475 = scmp.lt.s32.totalorder %s22, 1
          %s476 = scalar_select %p475, %s22, 1
          %s477 = smul.addr %s476, 4
          %s478 = smul.addr %s477, 4
          %s479 = scalar_lea.vmem %s5, %s478
        $region48: #{tpu_custom_call.1} parent=27 // pred_fallthru
          _
        // Predicated region
        $region49: #{tpu_custom_call.1} parent=27 // pred_check
          %p480 = pneg %p193
        $region50: #{tpu_custom_call.1} parent=27 // pred_check_branch
          %482 = sbr.rel (%p480) target = $region52
        $region51: #{tpu_custom_call.1} parent=27 // pred_region
          %p483 = scmp.lt.s32.totalorder %s22, 1
          %s484 = scalar_select %p483, %s22, 1
          %s485 = scalar_lea.vmem %s6, %s484
        $region52: #{tpu_custom_call.1} parent=27 // pred_fallthru
          _
        // Predicated region
        $region53: #{tpu_custom_call.1} parent=27 // pred_check
          %p486 = pneg %p219
        $region54: #{tpu_custom_call.1} parent=27 // pred_check_branch
          %488 = sbr.rel (%p486) target = $region56
        $region55: #{tpu_custom_call.1} parent=27 // pred_region
          %p489 = scmp.lt.s32.totalorder %s22, 1
          %s490 = scalar_select %p489, %s22, 1
          %s491 = scalar_lea.vmem %s7, %s490
        $region56: #{tpu_custom_call.1} parent=27 // pred_fallthru
          _
        // Predicated region
        $region57: #{tpu_custom_call.1} parent=27 // pred_check
          %p492 = pneg %p245
        $region58: #{tpu_custom_call.1} parent=27 // pred_check_branch
          %494 = sbr.rel (%p492) target = $region60
        $region59: #{tpu_custom_call.1} parent=27 // pred_region
          %p495 = scmp.lt.s32.totalorder %s22, 1
          %s496 = scalar_select %p495, %s22, 1
          %s497 = scalar_lea.vmem %s8, %s496
        $region60: #{tpu_custom_call.1} parent=27 // pred_fallthru
          _
        // Predicated region
        $region61: #{tpu_custom_call.1} parent=27 // pred_check
          %p498 = pneg %p271
        $region62: #{tpu_custom_call.1} parent=27 // pred_check_branch
          %500 = sbr.rel (%p498) target = $region64
        $region63: #{tpu_custom_call.1} parent=27 // pred_region
          %p501 = scmp.lt.s32.totalorder %s22, 1
          %s502 = scalar_select %p501, %s22, 1
          %s503 = smul.addr %s502, 4
          %s504 = smul.addr %s503, 4
          %s505 = scalar_lea.vmem %s9, %s504
        $region64: #{tpu_custom_call.1} parent=27 // pred_fallthru
          _
        // Predicated region
        $region65: #{tpu_custom_call.1} parent=27 // pred_check
          %p506 = pneg %p297
        $region66: #{tpu_custom_call.1} parent=27 // pred_check_branch
          %508 = sbr.rel (%p506) target = $region68
        $region67: #{tpu_custom_call.1} parent=27 // pred_region
          %p509 = scmp.lt.s32.totalorder %s22, 1
          %s510 = scalar_select %p509, %s22, 1
          %s511 = scalar_lea.vmem %s10, %s510
        $region68: #{tpu_custom_call.1} parent=27 // pred_fallthru
          _
        // Predicated region
        $region69: #{tpu_custom_call.1} parent=27 // pred_check
          %p512 = pneg %p323
        $region70: #{tpu_custom_call.1} parent=27 // pred_check_branch
          %514 = sbr.rel (%p512) target = $region72
        $region71: #{tpu_custom_call.1} parent=27 // pred_region
          %p515 = scmp.lt.s32.totalorder %s22, 1
          %s516 = scalar_select %p515, %s22, 1
          %s517 = smul.addr %s516, 16
          %s518 = smul.addr %s517, 4
          %s519 = scalar_lea.vmem %s11, %s518
        $region72: #{tpu_custom_call.1} parent=27 // pred_fallthru
          _
        // Predicated region
        $region73: #{tpu_custom_call.1} parent=27 // pred_check
          %p520 = pneg %p349
        $region74: #{tpu_custom_call.1} parent=27 // pred_check_branch
          %522 = sbr.rel (%p520) target = $region76
        $region75: #{tpu_custom_call.1} parent=27 // pred_region
          %p523 = scmp.lt.s32.totalorder %s22, 1
          %s524 = scalar_select %p523, %s22, 1
          %s525 = scalar_lea.vmem %s12, %s524
        $region76: #{tpu_custom_call.1} parent=27 // pred_fallthru
          _
      $region28: #{tpu_custom_call.1} parent=5 // pred_fallthru
        _
      %p526 = scmp.le.s32.totalorder 1, %s22
      %p527 = scmp.lt.s32.totalorder %s22, 3
      %p528 = pnand %p526, %p527
      %p529 = pneg %p528
      // Predicated region
      $region77: #{tpu_custom_call.1} parent=5 // pred_check
        _
      $region78: #{tpu_custom_call.1} parent=5 // pred_check_branch
        %531 = sbr.rel (%p528) target = $region80
      $region79: #{tpu_custom_call.1} parent=5 // pred_region
        %s532 = ssub.s32 %s22, 1
        %p533 = pneg %p43
        %p534 = pneg %p40
        %p535 = scmp.lt.s32.totalorder %s27, 1
        %s536 = scalar_select %p535, %s27, 1
        %s537 = scalar_lea.vmem %s1, %s536
        %p538 = pneg %p69
        %p539 = pneg %p66
        %p540 = scmp.lt.s32.totalorder %s27, 1
        %s541 = scalar_select %p540, %s27, 1
        %s542 = scalar_lea.vmem %s2, %s541
        %p543 = pneg %p95
        %p544 = pneg %p92
        %p545 = scmp.lt.s32.totalorder %s27, 1
        %s546 = scalar_select %p545, %s27, 1
        %s547 = smul.addr %s546, 4
        %s548 = smul.addr %s547, 4
        %s549 = scalar_lea.vmem %s3, %s548
        %p550 = pneg %p121
        %p551 = pneg %p118
        %p552 = scmp.lt.s32.totalorder %s27, 1
        %s553 = scalar_select %p552, %s27, 1
        %s554 = scalar_lea.vmem %s4, %s553
        %p555 = pneg %p147
        %p556 = pneg %p144
        %p557 = scmp.lt.s32.totalorder %s27, 1
        %s558 = scalar_select %p557, %s27, 1
        %s559 = smul.addr %s558, 4
        %s560 = smul.addr %s559, 4
        %s561 = scalar_lea.vmem %s5, %s560
        %p562 = pneg %p173
        %p563 = pneg %p170
        %p564 = scmp.lt.s32.totalorder %s27, 1
        %s565 = scalar_select %p564, %s27, 1
        %s566 = scalar_lea.vmem %s6, %s565
        %p567 = pneg %p199
        %p568 = pneg %p196
        %p569 = scmp.lt.s32.totalorder %s27, 1
        %s570 = scalar_select %p569, %s27, 1
        %s571 = scalar_lea.vmem %s7, %s570
        %p572 = pneg %p225
        %p573 = pneg %p222
        %p574 = scmp.lt.s32.totalorder %s27, 1
        %s575 = scalar_select %p574, %s27, 1
        %s576 = scalar_lea.vmem %s8, %s575
        %p577 = pneg %p251
        %p578 = pneg %p248
        %p579 = scmp.lt.s32.totalorder %s27, 1
        %s580 = scalar_select %p579, %s27, 1
        %s581 = smul.addr %s580, 4
        %s582 = smul.addr %s581, 4
        %s583 = scalar_lea.vmem %s9, %s582
        %p584 = pneg %p277
        %p585 = pneg %p274
        %p586 = scmp.lt.s32.totalorder %s27, 1
        %s587 = scalar_select %p586, %s27, 1
        %s588 = scalar_lea.vmem %s10, %s587
        %p589 = pneg %p303
        %p590 = pneg %p300
        %p591 = scmp.lt.s32.totalorder %s27, 1
        %s592 = scalar_select %p591, %s27, 1
        %s593 = smul.addr %s592, 16
        %s594 = smul.addr %s593, 4
        %s595 = scalar_lea.vmem %s11, %s594
        %p596 = pneg %p329
        %p597 = pneg %p326
        %p598 = scmp.lt.s32.totalorder %s27, 1
        %s599 = scalar_select %p598, %s27, 1
        %s600 = scalar_lea.vmem %s12, %s599
        %p601 = pneg %p355
        %p602 = pneg %p352
        %p603 = pneg %p376
        %p604 = pneg %p373
        %p605 = pneg %p397
        %p606 = pneg %p394
        %p607 = pneg %p418
        %p608 = pneg %p415
        %p609 = scmp.lt.s32.totalorder %s27, 1
        %s610 = scalar_select %p609, %s27, 1
        %s611 = scalar_lea.vmem %s1, %s610
        %p612 = scmp.lt.s32.totalorder %s27, 1
        %s613 = scalar_select %p612, %s27, 1
        %s614 = scalar_lea.vmem %s2, %s613
        %p615 = scmp.lt.s32.totalorder %s27, 1
        %s616 = scalar_select %p615, %s27, 1
        %s617 = smul.addr %s616, 4
        %s618 = smul.addr %s617, 4
        %s619 = scalar_lea.vmem %s3, %s618
        %p620 = scmp.lt.s32.totalorder %s27, 1
        %s621 = scalar_select %p620, %s27, 1
        %s622 = scalar_lea.vmem %s4, %s621
        %p623 = scmp.lt.s32.totalorder %s27, 1
        %s624 = scalar_select %p623, %s27, 1
        %s625 = smul.addr %s624, 4
        %s626 = smul.addr %s625, 4
        %s627 = scalar_lea.vmem %s5, %s626
        %p628 = scmp.lt.s32.totalorder %s27, 1
        %s629 = scalar_select %p628, %s27, 1
        %s630 = scalar_lea.vmem %s6, %s629
        %p631 = scmp.lt.s32.totalorder %s27, 1
        %s632 = scalar_select %p631, %s27, 1
        %s633 = scalar_lea.vmem %s7, %s632
        %p634 = scmp.lt.s32.totalorder %s27, 1
        %s635 = scalar_select %p634, %s27, 1
        %s636 = scalar_lea.vmem %s8, %s635
        %p637 = scmp.lt.s32.totalorder %s27, 1
        %s638 = scalar_select %p637, %s27, 1
        %s639 = smul.addr %s638, 4
        %s640 = smul.addr %s639, 4
        %s641 = scalar_lea.vmem %s9, %s640
        %p642 = scmp.lt.s32.totalorder %s27, 1
        %s643 = scalar_select %p642, %s27, 1
        %s644 = scalar_lea.vmem %s10, %s643
        %p645 = scmp.lt.s32.totalorder %s27, 1
        %s646 = scalar_select %p645, %s27, 1
        %s647 = smul.addr %s646, 16
        %s648 = smul.addr %s647, 4
        %s649 = scalar_lea.vmem %s11, %s648
        %p650 = scmp.lt.s32.totalorder %s27, 1
        %s651 = scalar_select %p650, %s27, 1
        %s652 = scalar_lea.vmem %s12, %s651
        %p654 = scmp.eq.s32.totalorder %s27, 0
        // Predicated region
        $region81: #{tpu_custom_call.1} parent=79 // pred_check
          %p655 = pneg %p654
        $region82: #{tpu_custom_call.1} parent=79 // pred_check_branch
          %657 = sbr.rel (%p655) target = $region84
        $region83: #{tpu_custom_call.1} parent=79 // pred_region
          %v658 = vld [vmem:[%s0] sm:$0xff]
          %v659 = vld [vmem:[%s0 + $0x8] sm:$0xff]
          %vm660 = vcmask 261120
          %661 = vst.msk [vmem:[#allocation2] sm:$0xff] %vm660, %v658
          %662 = vst.msk [vmem:[#allocation2 + $0x8] sm:$0xff] %vm660, %v659
        $region84: #{tpu_custom_call.1} parent=79 // pred_fallthru
          _
        %v663 = vld [vmem:[#allocation2] sm:$0xff]
        %v664 = vld [vmem:[#allocation2 + $0x8] sm:$0xff]
        %v665 = vld [vmem:[%s611] sm:$0x1]
        %v666 = vld [vmem:[%s614] sm:$0x1]
        %vm667 = vcmask 261120
        %v668 = vsel %vm667, %v663, 0.0
        %669 = vadd.xlane.f32.xlu0 %v668
        %v670 = vpop.xlane.xlu0 %669
        %v671 = vsel %vm667, %v664, 0.0
        %672 = vadd.xlane.f32.xlu0 %v671
        %v673 = vpop.xlane.xlu0 %672
        %v674 = vrcp.pop 32.0
        %v675 = vmul.f32 32.0, %v674
        %v676 = vsub.f32 1.0, %v675
        %v677 = vmul.f32 %v674, %v676
        %v678 = vadd.f32 %v674, %v677
        %vm679 = vweird.f32 %v674
        %v680 = vsel %vm679, %v674, %v678
        %v681 = vmul.f32 %v670, %v680
        %v682 = vmul.f32 %v673, %v680
        %v683 = vsub.f32 %v663, %v681
        %v684 = vsub.f32 %v664, %v682
        %v685 = vmul.f32 %v683, %v683
        %v686 = vmul.f32 %v684, %v684
        %v687 = vsel %vm667, %v685, 0.0
        %688 = vadd.xlane.f32.xlu0 %v687
        %v689 = vpop.xlane.xlu0 %688
        %v690 = vsel %vm667, %v686, 0.0
        %691 = vadd.xlane.f32.xlu0 %v690
        %v692 = vpop.xlane.xlu0 %691
        %v693 = vmul.f32 %v689, %v680
        %v694 = vmul.f32 %v692, %v680
        %v695 = vadd.f32 %v693, 1e-05
        %v696 = vadd.f32 %v694, 1e-05
        %v697 = vrsqrt.pop %v695
        %v698 = vmul.f32 %v697, %v695
        %v699 = vmul.f32 %v698, %v697
        %v700 = vmul.f32 0.5, %v699
        %v701 = vsub.f32 1.5, %v700
        %v702 = vmul.f32 %v697, %v701
        %vm703 = vweird.f32 %v695
        %vm704 = vweird.f32 %v697
        %vm705 = vmor %vm703, %vm704
        %v706 = vsel %vm705, %v697, %v702
        %v707 = vrsqrt.pop %v696
        %v708 = vmul.f32 %v707, %v696
        %v709 = vmul.f32 %v708, %v707
        %v710 = vmul.f32 0.5, %v709
        %v711 = vsub.f32 1.5, %v710
        %v712 = vmul.f32 %v707, %v711
        %vm713 = vweird.f32 %v696
        %vm714 = vweird.f32 %v707
        %vm715 = vmor %vm713, %vm714
        %v716 = vsel %vm715, %v707, %v712
        %v717 = vmul.f32 %v683, %v706
        %v718 = vmul.f32 %v684, %v716
        %v720 = vperm.slane %v665, 0
        %v722 = vmul.f32 %v717, %v720
        %v723 = vmul.f32 %v718, %v720
        %v725 = vperm.slane %v666, 0
        %v727 = vadd.f32 %v722, %v725
        %v728 = vadd.f32 %v723, %v725
        %v729 = vpack.c.bf16 %v728, %v727
        %v730 = vld [vmem:[%s619] sm:$0xf]
        %v731 = vld [vmem:[%s619 + $0x4] sm:$0xf]
        %v732 = vld [vmem:[%s619 + $0x8] sm:$0xf]
        %v733 = vld [vmem:[%s619 + $0xc] sm:$0xf]
        %v734 = vld [vmem:[%s622] sm:$0x1]
        %v736 = vperm.slane %v734, 0
        %v742 = vunpack.c.l.b16 %v730
        %v743 = vunpack.c.l.b16 %v731
        %v744 = vunpack.c.l.b16 %v732
        %v745 = vunpack.c.l.b16 %v733
        %v746 = vpack.c.b16 %v743, %v742
        %v747 = vpack.c.b16 %v745, %v744
        %v751 = vsel %vm667, %v729, 0
        %753 = vmatpush.bf16.msra.mxu0 0
        %754 = vmatpush.bf16.msra.mxu0 0
        %755 = vmatpush.bf16.msra.mxu0 0
        %756 = vmatpush.bf16.msra.mxu0 0
        %757 = vmatpush.bf16.msra.mxu0 0
        %758 = vmatpush.bf16.msra.mxu0 0
        %759 = vmatpush.bf16.msra.mxu0 %v747
        %760 = vmatpush.bf16.msra.mxu0 %v746
        %761 = vmatmul.bf16.gmra.mxu0 %v751
        %v762 = vpop.f32.mrf.mxu0
        %v763 = vadd.f32 %v736, %v762
        %v764 = vpop.f32.mrf.mxu0
        %v765 = vadd.f32 %v736, %v764
        %766 = vdwg.mxu0
        %769 = vrot.lane.b32.xlu0 %v763, 120
        %v770 = vpop.permute.xlu0 %769
        %771 = vrot.lane.b32.xlu0 %v765, 120
        %v772 = vpop.permute.xlu0 %771
        %775 = vrot.lane.b32.xlu0 %v763, 112
        %v776 = vpop.permute.xlu0 %775
        %777 = vrot.lane.b32.xlu0 %v765, 112
        %v778 = vpop.permute.xlu0 %777
        %781 = vrot.lane.b32.xlu0 %v763, 104
        %v782 = vpop.permute.xlu0 %781
        %783 = vrot.lane.b32.xlu0 %v765, 104
        %v784 = vpop.permute.xlu0 %783
        %v787 = vrot.slane %v776, 4
        %vm788 = vcmask 1047556
        %v789 = vsel %vm788, %v787, %v763
        %v790 = vrot.slane %v763, 4
        %v791 = vsel %vm788, %v776, %v790
        %v793 = vunpack.c.l.s4 1983009808
        %v794 = vunpack.c.0.s8 %v793
        %v795 = vperm.slane %v789, %v794
        %v797 = vunpack.c.l.s4 1983009808
        %v798 = vunpack.c.0.s8 %v797
        %v799 = vperm.slane %v791, %v798
        %v800 = vrot.slane %v782, 4
        %v801 = vsel %vm788, %v800, %v770
        %v802 = vrot.slane %v770, 4
        %v803 = vsel %vm788, %v782, %v802
        %v805 = vunpack.c.l.s4 1983009808
        %v806 = vunpack.c.0.s8 %v805
        %v807 = vperm.slane %v801, %v806
        %v809 = vunpack.c.l.s4 1983009808
        %v810 = vunpack.c.0.s8 %v809
        %v811 = vperm.slane %v803, %v810
        %v812 = vrot.slane %v807, 4
        %v813 = vsel %vm788, %v812, %v795
        %v814 = vrot.slane %v795, 4
        %v815 = vsel %vm788, %v807, %v814
        %v817 = vunpack.c.l.s4 1934713408
        %v818 = vunpack.c.0.s8 %v817
        %v819 = vperm.slane %v813, %v818
        %v821 = vunpack.c.l.s4 1934713408
        %v822 = vunpack.c.0.s8 %v821
        %v823 = vperm.slane %v815, %v822
        %v824 = vrot.slane %v811, 4
        %v825 = vsel %vm788, %v824, %v799
        %v826 = vrot.slane %v799, 4
        %v827 = vsel %vm788, %v811, %v826
        %v829 = vunpack.c.l.s4 1934713408
        %v830 = vunpack.c.0.s8 %v829
        %v831 = vperm.slane %v825, %v830
        %v833 = vunpack.c.l.s4 1934713408
        %v834 = vunpack.c.0.s8 %v833
        %v835 = vperm.slane %v827, %v834
        %v836 = vrot.slane %v819, 4
        %v837 = vsel %vm788, 0.0, %v836
        %v838 = vrot.slane %v823, 4
        %v839 = vsel %vm788, 0.0, %v838
        %v840 = vrot.slane %v831, 4
        %v841 = vsel %vm788, 0.0, %v840
        %v842 = vrot.slane %v835, 4
        %v843 = vsel %vm788, 0.0, %v842
        %v844 = vrot.slane %v778, 4
        %v845 = vsel %vm788, %v844, %v765
        %v846 = vrot.slane %v765, 4
        %v847 = vsel %vm788, %v778, %v846
        %v849 = vunpack.c.l.s4 1983009808
        %v850 = vunpack.c.0.s8 %v849
        %v851 = vperm.slane %v845, %v850
        %v853 = vunpack.c.l.s4 1983009808
        %v854 = vunpack.c.0.s8 %v853
        %v855 = vperm.slane %v847, %v854
        %v856 = vrot.slane %v784, 4
        %v857 = vsel %vm788, %v856, %v772
        %v858 = vrot.slane %v772, 4
        %v859 = vsel %vm788, %v784, %v858
        %v861 = vunpack.c.l.s4 1983009808
        %v862 = vunpack.c.0.s8 %v861
        %v863 = vperm.slane %v857, %v862
        %v865 = vunpack.c.l.s4 1983009808
        %v866 = vunpack.c.0.s8 %v865
        %v867 = vperm.slane %v859, %v866
        %v868 = vrot.slane %v863, 4
        %v869 = vsel %vm788, %v868, %v851
        %v870 = vrot.slane %v851, 4
        %v871 = vsel %vm788, %v863, %v870
        %v873 = vunpack.c.l.s4 1934713408
        %v874 = vunpack.c.0.s8 %v873
        %v875 = vperm.slane %v869, %v874
        %v877 = vunpack.c.l.s4 1934713408
        %v878 = vunpack.c.0.s8 %v877
        %v879 = vperm.slane %v871, %v878
        %v880 = vrot.slane %v867, 4
        %v881 = vsel %vm788, %v880, %v855
        %v882 = vrot.slane %v855, 4
        %v883 = vsel %vm788, %v867, %v882
        %v885 = vunpack.c.l.s4 1934713408
        %v886 = vunpack.c.0.s8 %v885
        %v887 = vperm.slane %v881, %v886
        %v889 = vunpack.c.l.s4 1934713408
        %v890 = vunpack.c.0.s8 %v889
        %v891 = vperm.slane %v883, %v890
        %v892 = vrot.slane %v875, 4
        %v893 = vsel %vm788, 0.0, %v892
        %v894 = vrot.slane %v879, 4
        %v895 = vsel %vm788, 0.0, %v894
        %v896 = vrot.slane %v887, 4
        %v897 = vsel %vm788, 0.0, %v896
        %v898 = vrot.slane %v891, 4
        %v899 = vsel %vm788, 0.0, %v898
        %v900 = vsel %vm788, %v838, %v819
        %v902 = vunpack.c.l.s4 1983009808
        %v903 = vunpack.c.0.s8 %v902
        %v904 = vperm.slane %v900, %v903
        %v905 = vrot.slane %v839, 4
        %v906 = vsel %vm788, %v905, %v837
        %v908 = vunpack.c.l.s4 1983009808
        %v909 = vunpack.c.0.s8 %v908
        %v910 = vperm.slane %v906, %v909
        %v911 = vsel %vm788, %v842, %v831
        %v913 = vunpack.c.l.s4 1983009808
        %v914 = vunpack.c.0.s8 %v913
        %v915 = vperm.slane %v911, %v914
        %v916 = vrot.slane %v843, 4
        %v917 = vsel %vm788, %v916, %v841
        %v919 = vunpack.c.l.s4 1983009808
        %v920 = vunpack.c.0.s8 %v919
        %v921 = vperm.slane %v917, %v920
        %v922 = vrot.slane %v910, 4
        %v923 = vsel %vm788, %v922, %v904
        %v924 = vrot.slane %v904, 4
        %v925 = vsel %vm788, %v910, %v924
        %v927 = vunpack.c.l.s4 1934713408
        %v928 = vunpack.c.0.s8 %v927
        %v929 = vperm.slane %v923, %v928
        %v931 = vunpack.c.l.s4 1934713408
        %v932 = vunpack.c.0.s8 %v931
        %v933 = vperm.slane %v925, %v932
        %v934 = vrot.slane %v921, 4
        %v935 = vsel %vm788, %v934, %v915
        %v936 = vrot.slane %v915, 4
        %v937 = vsel %vm788, %v921, %v936
        %v939 = vunpack.c.l.s4 1934713408
        %v940 = vunpack.c.0.s8 %v939
        %v941 = vperm.slane %v935, %v940
        %v943 = vunpack.c.l.s4 1934713408
        %v944 = vunpack.c.0.s8 %v943
        %v945 = vperm.slane %v937, %v944
        %v946 = vrot.slane %v941, 4
        %v947 = vsel %vm788, %v946, %v929
        %v948 = vrot.slane %v929, 4
        %v949 = vsel %vm788, %v941, %v948
        %v950 = vrot.slane %v945, 4
        %v951 = vsel %vm788, %v950, %v933
        %v952 = vrot.slane %v933, 4
        %v953 = vsel %vm788, %v945, %v952
        %v954 = vsel %vm788, %v894, %v875
        %v956 = vunpack.c.l.s4 1983009808
        %v957 = vunpack.c.0.s8 %v956
        %v958 = vperm.slane %v954, %v957
        %v959 = vrot.slane %v895, 4
        %v960 = vsel %vm788, %v959, %v893
        %v962 = vunpack.c.l.s4 1983009808
        %v963 = vunpack.c.0.s8 %v962
        %v964 = vperm.slane %v960, %v963
        %v965 = vsel %vm788, %v898, %v887
        %v967 = vunpack.c.l.s4 1983009808
        %v968 = vunpack.c.0.s8 %v967
        %v969 = vperm.slane %v965, %v968
        %v970 = vrot.slane %v899, 4
        %v971 = vsel %vm788, %v970, %v897
        %v973 = vunpack.c.l.s4 1983009808
        %v974 = vunpack.c.0.s8 %v973
        %v975 = vperm.slane %v971, %v974
        %v976 = vrot.slane %v964, 4
        %v977 = vsel %vm788, %v976, %v958
        %v978 = vrot.slane %v958, 4
        %v979 = vsel %vm788, %v964, %v978
        %v981 = vunpack.c.l.s4 1934713408
        %v982 = vunpack.c.0.s8 %v981
        %v983 = vperm.slane %v977, %v982
        %v985 = vunpack.c.l.s4 1934713408
        %v986 = vunpack.c.0.s8 %v985
        %v987 = vperm.slane %v979, %v986
        %v988 = vrot.slane %v975, 4
        %v989 = vsel %vm788, %v988, %v969
        %v990 = vrot.slane %v969, 4
        %v991 = vsel %vm788, %v975, %v990
        %v993 = vunpack.c.l.s4 1934713408
        %v994 = vunpack.c.0.s8 %v993
        %v995 = vperm.slane %v989, %v994
        %v997 = vunpack.c.l.s4 1934713408
        %v998 = vunpack.c.0.s8 %v997
        %v999 = vperm.slane %v991, %v998
        %v1000 = vrot.slane %v995, 4
        %v1001 = vsel %vm788, %v1000, %v983
        %v1002 = vrot.slane %v983, 4
        %v1003 = vsel %vm788, %v995, %v1002
        %v1004 = vrot.slane %v999, 4
        %v1005 = vsel %vm788, %v1004, %v987
        %v1006 = vrot.slane %v987, 4
        %v1007 = vsel %vm788, %v999, %v1006
        %v1008 = vpack.c.bf16 %v947, %v947
        %v1009 = vpack.c.bf16 %v949, %v949
        %v1010 = vpack.c.bf16 %v951, %v951
        %v1011 = vpack.c.bf16 %v953, %v953
        %v1012 = vpack.c.bf16 %v1001, %v1001
        %v1013 = vpack.c.bf16 %v1003, %v1003
        %v1014 = vpack.c.bf16 %v1005, %v1005
        %v1015 = vpack.c.bf16 %v1007, %v1007
        %1016 = vrot.lane.b32.xlu0 %v763, 96
        %v1017 = vpop.permute.xlu0 %1016
        %1018 = vrot.lane.b32.xlu0 %v765, 96
        %v1019 = vpop.permute.xlu0 %1018
        %1020 = vrot.lane.b32.xlu0 %v770, 96
        %v1021 = vpop.permute.xlu0 %1020
        %1022 = vrot.lane.b32.xlu0 %v772, 96
        %v1023 = vpop.permute.xlu0 %1022
        %1024 = vrot.lane.b32.xlu0 %v776, 96
        %v1025 = vpop.permute.xlu0 %1024
        %1026 = vrot.lane.b32.xlu0 %v778, 96
        %v1027 = vpop.permute.xlu0 %1026
        %1028 = vrot.lane.b32.xlu0 %v782, 96
        %v1029 = vpop.permute.xlu0 %1028
        %1030 = vrot.lane.b32.xlu0 %v784, 96
        %v1031 = vpop.permute.xlu0 %1030
        %v1040 = vrot.slane %v1025, 4
        %v1041 = vsel %vm788, %v1040, %v1017
        %v1042 = vrot.slane %v1017, 4
        %v1043 = vsel %vm788, %v1025, %v1042
        %v1045 = vunpack.c.l.s4 1983009808
        %v1046 = vunpack.c.0.s8 %v1045
        %v1047 = vperm.slane %v1041, %v1046
        %v1049 = vunpack.c.l.s4 1983009808
        %v1050 = vunpack.c.0.s8 %v1049
        %v1051 = vperm.slane %v1043, %v1050
        %v1052 = vrot.slane %v1029, 4
        %v1053 = vsel %vm788, %v1052, %v1021
        %v1054 = vrot.slane %v1021, 4
        %v1055 = vsel %vm788, %v1029, %v1054
        %v1057 = vunpack.c.l.s4 1983009808
        %v1058 = vunpack.c.0.s8 %v1057
        %v1059 = vperm.slane %v1053, %v1058
        %v1061 = vunpack.c.l.s4 1983009808
        %v1062 = vunpack.c.0.s8 %v1061
        %v1063 = vperm.slane %v1055, %v1062
        %v1064 = vrot.slane %v1059, 4
        %v1065 = vsel %vm788, %v1064, %v1047
        %v1066 = vrot.slane %v1047, 4
        %v1067 = vsel %vm788, %v1059, %v1066
        %v1069 = vunpack.c.l.s4 1934713408
        %v1070 = vunpack.c.0.s8 %v1069
        %v1071 = vperm.slane %v1065, %v1070
        %v1073 = vunpack.c.l.s4 1934713408
        %v1074 = vunpack.c.0.s8 %v1073
        %v1075 = vperm.slane %v1067, %v1074
        %v1076 = vrot.slane %v1063, 4
        %v1077 = vsel %vm788, %v1076, %v1051
        %v1078 = vrot.slane %v1051, 4
        %v1079 = vsel %vm788, %v1063, %v1078
        %v1081 = vunpack.c.l.s4 1934713408
        %v1082 = vunpack.c.0.s8 %v1081
        %v1083 = vperm.slane %v1077, %v1082
        %v1085 = vunpack.c.l.s4 1934713408
        %v1086 = vunpack.c.0.s8 %v1085
        %v1087 = vperm.slane %v1079, %v1086
        %v1088 = vrot.slane %v1071, 4
        %v1089 = vsel %vm788, 0.0, %v1088
        %v1090 = vrot.slane %v1075, 4
        %v1091 = vsel %vm788, 0.0, %v1090
        %v1092 = vrot.slane %v1083, 4
        %v1093 = vsel %vm788, 0.0, %v1092
        %v1094 = vrot.slane %v1087, 4
        %v1095 = vsel %vm788, 0.0, %v1094
        %v1096 = vrot.slane %v1027, 4
        %v1097 = vsel %vm788, %v1096, %v1019
        %v1098 = vrot.slane %v1019, 4
        %v1099 = vsel %vm788, %v1027, %v1098
        %v1101 = vunpack.c.l.s4 1983009808
        %v1102 = vunpack.c.0.s8 %v1101
        %v1103 = vperm.slane %v1097, %v1102
        %v1105 = vunpack.c.l.s4 1983009808
        %v1106 = vunpack.c.0.s8 %v1105
        %v1107 = vperm.slane %v1099, %v1106
        %v1108 = vrot.slane %v1031, 4
        %v1109 = vsel %vm788, %v1108, %v1023
        %v1110 = vrot.slane %v1023, 4
        %v1111 = vsel %vm788, %v1031, %v1110
        %v1113 = vunpack.c.l.s4 1983009808
        %v1114 = vunpack.c.0.s8 %v1113
        %v1115 = vperm.slane %v1109, %v1114
        %v1117 = vunpack.c.l.s4 1983009808
        %v1118 = vunpack.c.0.s8 %v1117
        %v1119 = vperm.slane %v1111, %v1118
        %v1120 = vrot.slane %v1115, 4
        %v1121 = vsel %vm788, %v1120, %v1103
        %v1122 = vrot.slane %v1103, 4
        %v1123 = vsel %vm788, %v1115, %v1122
        %v1125 = vunpack.c.l.s4 1934713408
        %v1126 = vunpack.c.0.s8 %v1125
        %v1127 = vperm.slane %v1121, %v1126
        %v1129 = vunpack.c.l.s4 1934713408
        %v1130 = vunpack.c.0.s8 %v1129
        %v1131 = vperm.slane %v1123, %v1130
        %v1132 = vrot.slane %v1119, 4
        %v1133 = vsel %vm788, %v1132, %v1107
        %v1134 = vrot.slane %v1107, 4
        %v1135 = vsel %vm788, %v1119, %v1134
        %v1137 = vunpack.c.l.s4 1934713408
        %v1138 = vunpack.c.0.s8 %v1137
        %v1139 = vperm.slane %v1133, %v1138
        %v1141 = vunpack.c.l.s4 1934713408
        %v1142 = vunpack.c.0.s8 %v1141
        %v1143 = vperm.slane %v1135, %v1142
        %v1144 = vrot.slane %v1127, 4
        %v1145 = vsel %vm788, 0.0, %v1144
        %v1146 = vrot.slane %v1131, 4
        %v1147 = vsel %vm788, 0.0, %v1146
        %v1148 = vrot.slane %v1139, 4
        %v1149 = vsel %vm788, 0.0, %v1148
        %v1150 = vrot.slane %v1143, 4
        %v1151 = vsel %vm788, 0.0, %v1150
        %v1152 = vsel %vm788, %v1090, %v1071
        %v1154 = vunpack.c.l.s4 1983009808
        %v1155 = vunpack.c.0.s8 %v1154
        %v1156 = vperm.slane %v1152, %v1155
        %v1157 = vrot.slane %v1091, 4
        %v1158 = vsel %vm788, %v1157, %v1089
        %v1160 = vunpack.c.l.s4 1983009808
        %v1161 = vunpack.c.0.s8 %v1160
        %v1162 = vperm.slane %v1158, %v1161
        %v1163 = vsel %vm788, %v1094, %v1083
        %v1165 = vunpack.c.l.s4 1983009808
        %v1166 = vunpack.c.0.s8 %v1165
        %v1167 = vperm.slane %v1163, %v1166
        %v1168 = vrot.slane %v1095, 4
        %v1169 = vsel %vm788, %v1168, %v1093
        %v1171 = vunpack.c.l.s4 1983009808
        %v1172 = vunpack.c.0.s8 %v1171
        %v1173 = vperm.slane %v1169, %v1172
        %v1174 = vrot.slane %v1162, 4
        %v1175 = vsel %vm788, %v1174, %v1156
        %v1176 = vrot.slane %v1156, 4
        %v1177 = vsel %vm788, %v1162, %v1176
        %v1179 = vunpack.c.l.s4 1934713408
        %v1180 = vunpack.c.0.s8 %v1179
        %v1181 = vperm.slane %v1175, %v1180
        %v1183 = vunpack.c.l.s4 1934713408
        %v1184 = vunpack.c.0.s8 %v1183
        %v1185 = vperm.slane %v1177, %v1184
        %v1186 = vrot.slane %v1173, 4
        %v1187 = vsel %vm788, %v1186, %v1167
        %v1188 = vrot.slane %v1167, 4
        %v1189 = vsel %vm788, %v1173, %v1188
        %v1191 = vunpack.c.l.s4 1934713408
        %v1192 = vunpack.c.0.s8 %v1191
        %v1193 = vperm.slane %v1187, %v1192
        %v1195 = vunpack.c.l.s4 1934713408
        %v1196 = vunpack.c.0.s8 %v1195
        %v1197 = vperm.slane %v1189, %v1196
        %v1198 = vrot.slane %v1193, 4
        %v1199 = vsel %vm788, %v1198, %v1181
        %v1200 = vrot.slane %v1181, 4
        %v1201 = vsel %vm788, %v1193, %v1200
        %v1202 = vrot.slane %v1197, 4
        %v1203 = vsel %vm788, %v1202, %v1185
        %v1204 = vrot.slane %v1185, 4
        %v1205 = vsel %vm788, %v1197, %v1204
        %v1206 = vsel %vm788, %v1146, %v1127
        %v1208 = vunpack.c.l.s4 1983009808
        %v1209 = vunpack.c.0.s8 %v1208
        %v1210 = vperm.slane %v1206, %v1209
        %v1211 = vrot.slane %v1147, 4
        %v1212 = vsel %vm788, %v1211, %v1145
        %v1214 = vunpack.c.l.s4 1983009808
        %v1215 = vunpack.c.0.s8 %v1214
        %v1216 = vperm.slane %v1212, %v1215
        %v1217 = vsel %vm788, %v1150, %v1139
        %v1219 = vunpack.c.l.s4 1983009808
        %v1220 = vunpack.c.0.s8 %v1219
        %v1221 = vperm.slane %v1217, %v1220
        %v1222 = vrot.slane %v1151, 4
        %v1223 = vsel %vm788, %v1222, %v1149
        %v1225 = vunpack.c.l.s4 1983009808
        %v1226 = vunpack.c.0.s8 %v1225
        %v1227 = vperm.slane %v1223, %v1226
        %v1228 = vrot.slane %v1216, 4
        %v1229 = vsel %vm788, %v1228, %v1210
        %v1230 = vrot.slane %v1210, 4
        %v1231 = vsel %vm788, %v1216, %v1230
        %v1233 = vunpack.c.l.s4 1934713408
        %v1234 = vunpack.c.0.s8 %v1233
        %v1235 = vperm.slane %v1229, %v1234
        %v1237 = vunpack.c.l.s4 1934713408
        %v1238 = vunpack.c.0.s8 %v1237
        %v1239 = vperm.slane %v1231, %v1238
        %v1240 = vrot.slane %v1227, 4
        %v1241 = vsel %vm788, %v1240, %v1221
        %v1242 = vrot.slane %v1221, 4
        %v1243 = vsel %vm788, %v1227, %v1242
        %v1245 = vunpack.c.l.s4 1934713408
        %v1246 = vunpack.c.0.s8 %v1245
        %v1247 = vperm.slane %v1241, %v1246
        %v1249 = vunpack.c.l.s4 1934713408
        %v1250 = vunpack.c.0.s8 %v1249
        %v1251 = vperm.slane %v1243, %v1250
        %v1252 = vrot.slane %v1247, 4
        %v1253 = vsel %vm788, %v1252, %v1235
        %v1254 = vrot.slane %v1235, 4
        %v1255 = vsel %vm788, %v1247, %v1254
        %v1256 = vrot.slane %v1251, 4
        %v1257 = vsel %vm788, %v1256, %v1239
        %v1258 = vrot.slane %v1239, 4
        %v1259 = vsel %vm788, %v1251, %v1258
        %v1260 = vpack.c.bf16 %v1199, %v1199
        %v1261 = vpack.c.bf16 %v1201, %v1201
        %v1262 = vpack.c.bf16 %v1203, %v1203
        %v1263 = vpack.c.bf16 %v1205, %v1205
        %v1264 = vpack.c.bf16 %v1253, %v1253
        %v1265 = vpack.c.bf16 %v1255, %v1255
        %v1266 = vpack.c.bf16 %v1257, %v1257
        %v1267 = vpack.c.bf16 %v1259, %v1259
        %1268 = vrot.lane.b32.xlu0 %v763, 64
        %v1269 = vpop.permute.xlu0 %1268
        %1270 = vrot.lane.b32.xlu0 %v765, 64
        %v1271 = vpop.permute.xlu0 %1270
        %1272 = vrot.lane.b32.xlu0 %v770, 64
        %v1273 = vpop.permute.xlu0 %1272
        %1274 = vrot.lane.b32.xlu0 %v772, 64
        %v1275 = vpop.permute.xlu0 %1274
        %1276 = vrot.lane.b32.xlu0 %v776, 64
        %v1277 = vpop.permute.xlu0 %1276
        %1278 = vrot.lane.b32.xlu0 %v778, 64
        %v1279 = vpop.permute.xlu0 %1278
        %1280 = vrot.lane.b32.xlu0 %v782, 64
        %v1281 = vpop.permute.xlu0 %1280
        %1282 = vrot.lane.b32.xlu0 %v784, 64
        %v1283 = vpop.permute.xlu0 %1282
        %v1292 = vrot.slane %v1277, 4
        %v1293 = vsel %vm788, %v1292, %v1269
        %v1294 = vrot.slane %v1269, 4
        %v1295 = vsel %vm788, %v1277, %v1294
        %v1297 = vunpack.c.l.s4 1983009808
        %v1298 = vunpack.c.0.s8 %v1297
        %v1299 = vperm.slane %v1293, %v1298
        %v1301 = vunpack.c.l.s4 1983009808
        %v1302 = vunpack.c.0.s8 %v1301
        %v1303 = vperm.slane %v1295, %v1302
        %v1304 = vrot.slane %v1281, 4
        %v1305 = vsel %vm788, %v1304, %v1273
        %v1306 = vrot.slane %v1273, 4
        %v1307 = vsel %vm788, %v1281, %v1306
        %v1309 = vunpack.c.l.s4 1983009808
        %v1310 = vunpack.c.0.s8 %v1309
        %v1311 = vperm.slane %v1305, %v1310
        %v1313 = vunpack.c.l.s4 1983009808
        %v1314 = vunpack.c.0.s8 %v1313
        %v1315 = vperm.slane %v1307, %v1314
        %v1316 = vrot.slane %v1311, 4
        %v1317 = vsel %vm788, %v1316, %v1299
        %v1318 = vrot.slane %v1299, 4
        %v1319 = vsel %vm788, %v1311, %v1318
        %v1321 = vunpack.c.l.s4 1934713408
        %v1322 = vunpack.c.0.s8 %v1321
        %v1323 = vperm.slane %v1317, %v1322
        %v1325 = vunpack.c.l.s4 1934713408
        %v1326 = vunpack.c.0.s8 %v1325
        %v1327 = vperm.slane %v1319, %v1326
        %v1328 = vrot.slane %v1315, 4
        %v1329 = vsel %vm788, %v1328, %v1303
        %v1330 = vrot.slane %v1303, 4
        %v1331 = vsel %vm788, %v1315, %v1330
        %v1333 = vunpack.c.l.s4 1934713408
        %v1334 = vunpack.c.0.s8 %v1333
        %v1335 = vperm.slane %v1329, %v1334
        %v1337 = vunpack.c.l.s4 1934713408
        %v1338 = vunpack.c.0.s8 %v1337
        %v1339 = vperm.slane %v1331, %v1338
        %v1340 = vrot.slane %v1323, 4
        %v1341 = vsel %vm788, 0.0, %v1340
        %v1342 = vrot.slane %v1327, 4
        %v1343 = vsel %vm788, 0.0, %v1342
        %v1344 = vrot.slane %v1335, 4
        %v1345 = vsel %vm788, 0.0, %v1344
        %v1346 = vrot.slane %v1339, 4
        %v1347 = vsel %vm788, 0.0, %v1346
        %v1348 = vrot.slane %v1279, 4
        %v1349 = vsel %vm788, %v1348, %v1271
        %v1350 = vrot.slane %v1271, 4
        %v1351 = vsel %vm788, %v1279, %v1350
        %v1353 = vunpack.c.l.s4 1983009808
        %v1354 = vunpack.c.0.s8 %v1353
        %v1355 = vperm.slane %v1349, %v1354
        %v1357 = vunpack.c.l.s4 1983009808
        %v1358 = vunpack.c.0.s8 %v1357
        %v1359 = vperm.slane %v1351, %v1358
        %v1360 = vrot.slane %v1283, 4
        %v1361 = vsel %vm788, %v1360, %v1275
        %v1362 = vrot.slane %v1275, 4
        %v1363 = vsel %vm788, %v1283, %v1362
        %v1365 = vunpack.c.l.s4 1983009808
        %v1366 = vunpack.c.0.s8 %v1365
        %v1367 = vperm.slane %v1361, %v1366
        %v1369 = vunpack.c.l.s4 1983009808
        %v1370 = vunpack.c.0.s8 %v1369
        %v1371 = vperm.slane %v1363, %v1370
        %v1372 = vrot.slane %v1367, 4
        %v1373 = vsel %vm788, %v1372, %v1355
        %v1374 = vrot.slane %v1355, 4
        %v1375 = vsel %vm788, %v1367, %v1374
        %v1377 = vunpack.c.l.s4 1934713408
        %v1378 = vunpack.c.0.s8 %v1377
        %v1379 = vperm.slane %v1373, %v1378
        %v1381 = vunpack.c.l.s4 1934713408
        %v1382 = vunpack.c.0.s8 %v1381
        %v1383 = vperm.slane %v1375, %v1382
        %v1384 = vrot.slane %v1371, 4
        %v1385 = vsel %vm788, %v1384, %v1359
        %v1386 = vrot.slane %v1359, 4
        %v1387 = vsel %vm788, %v1371, %v1386
        %v1389 = vunpack.c.l.s4 1934713408
        %v1390 = vunpack.c.0.s8 %v1389
        %v1391 = vperm.slane %v1385, %v1390
        %v1393 = vunpack.c.l.s4 1934713408
        %v1394 = vunpack.c.0.s8 %v1393
        %v1395 = vperm.slane %v1387, %v1394
        %v1396 = vrot.slane %v1379, 4
        %v1397 = vsel %vm788, 0.0, %v1396
        %v1398 = vrot.slane %v1383, 4
        %v1399 = vsel %vm788, 0.0, %v1398
        %v1400 = vrot.slane %v1391, 4
        %v1401 = vsel %vm788, 0.0, %v1400
        %v1402 = vrot.slane %v1395, 4
        %v1403 = vsel %vm788, 0.0, %v1402
        %v1404 = vsel %vm788, %v1342, %v1323
        %v1406 = vunpack.c.l.s4 1983009808
        %v1407 = vunpack.c.0.s8 %v1406
        %v1408 = vperm.slane %v1404, %v1407
        %v1409 = vrot.slane %v1343, 4
        %v1410 = vsel %vm788, %v1409, %v1341
        %v1412 = vunpack.c.l.s4 1983009808
        %v1413 = vunpack.c.0.s8 %v1412
        %v1414 = vperm.slane %v1410, %v1413
        %v1415 = vsel %vm788, %v1346, %v1335
        %v1417 = vunpack.c.l.s4 1983009808
        %v1418 = vunpack.c.0.s8 %v1417
        %v1419 = vperm.slane %v1415, %v1418
        %v1420 = vrot.slane %v1347, 4
        %v1421 = vsel %vm788, %v1420, %v1345
        %v1423 = vunpack.c.l.s4 1983009808
        %v1424 = vunpack.c.0.s8 %v1423
        %v1425 = vperm.slane %v1421, %v1424
        %v1426 = vrot.slane %v1414, 4
        %v1427 = vsel %vm788, %v1426, %v1408
        %v1428 = vrot.slane %v1408, 4
        %v1429 = vsel %vm788, %v1414, %v1428
        %v1431 = vunpack.c.l.s4 1934713408
        %v1432 = vunpack.c.0.s8 %v1431
        %v1433 = vperm.slane %v1427, %v1432
        %v1435 = vunpack.c.l.s4 1934713408
        %v1436 = vunpack.c.0.s8 %v1435
        %v1437 = vperm.slane %v1429, %v1436
        %v1438 = vrot.slane %v1425, 4
        %v1439 = vsel %vm788, %v1438, %v1419
        %v1440 = vrot.slane %v1419, 4
        %v1441 = vsel %vm788, %v1425, %v1440
        %v1443 = vunpack.c.l.s4 1934713408
        %v1444 = vunpack.c.0.s8 %v1443
        %v1445 = vperm.slane %v1439, %v1444
        %v1447 = vunpack.c.l.s4 1934713408
        %v1448 = vunpack.c.0.s8 %v1447
        %v1449 = vperm.slane %v1441, %v1448
        %v1450 = vrot.slane %v1445, 4
        %v1451 = vsel %vm788, %v1450, %v1433
        %v1452 = vrot.slane %v1433, 4
        %v1453 = vsel %vm788, %v1445, %v1452
        %v1454 = vrot.slane %v1449, 4
        %v1455 = vsel %vm788, %v1454, %v1437
        %v1456 = vrot.slane %v1437, 4
        %v1457 = vsel %vm788, %v1449, %v1456
        %v1458 = vsel %vm788, %v1398, %v1379
        %v1460 = vunpack.c.l.s4 1983009808
        %v1461 = vunpack.c.0.s8 %v1460
        %v1462 = vperm.slane %v1458, %v1461
        %v1463 = vrot.slane %v1399, 4
        %v1464 = vsel %vm788, %v1463, %v1397
        %v1466 = vunpack.c.l.s4 1983009808
        %v1467 = vunpack.c.0.s8 %v1466
        %v1468 = vperm.slane %v1464, %v1467
        %v1469 = vsel %vm788, %v1402, %v1391
        %v1471 = vunpack.c.l.s4 1983009808
        %v1472 = vunpack.c.0.s8 %v1471
        %v1473 = vperm.slane %v1469, %v1472
        %v1474 = vrot.slane %v1403, 4
        %v1475 = vsel %vm788, %v1474, %v1401
        %v1477 = vunpack.c.l.s4 1983009808
        %v1478 = vunpack.c.0.s8 %v1477
        %v1479 = vperm.slane %v1475, %v1478
        %v1480 = vrot.slane %v1468, 4
        %v1481 = vsel %vm788, %v1480, %v1462
        %v1482 = vrot.slane %v1462, 4
        %v1483 = vsel %vm788, %v1468, %v1482
        %v1485 = vunpack.c.l.s4 1934713408
        %v1486 = vunpack.c.0.s8 %v1485
        %v1487 = vperm.slane %v1481, %v1486
        %v1489 = vunpack.c.l.s4 1934713408
        %v1490 = vunpack.c.0.s8 %v1489
        %v1491 = vperm.slane %v1483, %v1490
        %v1492 = vrot.slane %v1479, 4
        %v1493 = vsel %vm788, %v1492, %v1473
        %v1494 = vrot.slane %v1473, 4
        %v1495 = vsel %vm788, %v1479, %v1494
        %v1497 = vunpack.c.l.s4 1934713408
        %v1498 = vunpack.c.0.s8 %v1497
        %v1499 = vperm.slane %v1493, %v1498
        %v1501 = vunpack.c.l.s4 1934713408
        %v1502 = vunpack.c.0.s8 %v1501
        %v1503 = vperm.slane %v1495, %v1502
        %v1504 = vrot.slane %v1499, 4
        %v1505 = vsel %vm788, %v1504, %v1487
        %v1506 = vrot.slane %v1487, 4
        %v1507 = vsel %vm788, %v1499, %v1506
        %v1508 = vrot.slane %v1503, 4
        %v1509 = vsel %vm788, %v1508, %v1491
        %v1510 = vrot.slane %v1491, 4
        %v1511 = vsel %vm788, %v1503, %v1510
        %v1512 = vpack.c.bf16 %v1451, %v1451
        %v1513 = vpack.c.bf16 %v1453, %v1453
        %v1514 = vpack.c.bf16 %v1455, %v1455
        %v1515 = vpack.c.bf16 %v1457, %v1457
        %v1516 = vpack.c.bf16 %v1505, %v1505
        %v1517 = vpack.c.bf16 %v1507, %v1507
        %v1518 = vpack.c.bf16 %v1509, %v1509
        %v1519 = vpack.c.bf16 %v1511, %v1511
        %v1520 = vlaneseq
        %v1521 = vshrl.u32 %v1520, 7
        %v1522 = vlaneseq
        %v1523 = vand.u32 %v1522, 127
        %vm1524 = vcmp.ge.s32.totalorder %v1521, %v1523
        %v1525 = vsel %vm1524, 0.0, -1e+30
        %vm1526 = vcmask 64512
        %v1528 = vsel %vm1526, %v1008, 0
        %v1531 = vsel %vm1526, %v1260, 0
        %1533 = vmatpush.bf16.xpose.msra.mxu0 0
        %1534 = vmatpush.bf16.xpose.msra.mxu0 0
        %1535 = vmatpush.bf16.xpose.msra.mxu0 0
        %1536 = vmatpush.bf16.xpose.msra.mxu0 0
        %1537 = vmatpush.bf16.xpose.msra.mxu0 0
        %1538 = vmatpush.bf16.xpose.msra.mxu0 0
        %1539 = vmatpush.bf16.xpose.msra.mxu0 0
        %1540 = vmatpush.bf16.xpose.msra.mxu0 %v1531
        %1541 = vmatmul.bf16.gmra.mxu0 %v1528
        %v1542 = vpop.f32.mrf.mxu0
        %v1543 = vadd.f32 %v1525, %v1542
        %v1544 = vpop.f32.mrf.mxu0
        %1545 = vdwg.mxu0
        %v1547 = vsel %vm1526, %v1009, 0
        %v1550 = vsel %vm1526, %v1261, 0
        %1552 = vmatpush.bf16.xpose.msra.mxu0 0
        %1553 = vmatpush.bf16.xpose.msra.mxu0 0
        %1554 = vmatpush.bf16.xpose.msra.mxu0 0
        %1555 = vmatpush.bf16.xpose.msra.mxu0 0
        %1556 = vmatpush.bf16.xpose.msra.mxu0 0
        %1557 = vmatpush.bf16.xpose.msra.mxu0 0
        %1558 = vmatpush.bf16.xpose.msra.mxu0 0
        %1559 = vmatpush.bf16.xpose.msra.mxu0 %v1550
        %1560 = vmatmul.bf16.gmra.mxu0 %v1547
        %v1561 = vpop.f32.mrf.mxu0
        %v1562 = vadd.f32 %v1525, %v1561
        %v1563 = vpop.f32.mrf.mxu0
        %1564 = vdwg.mxu0
        %v1566 = vsel %vm1526, %v1010, 0
        %v1569 = vsel %vm1526, %v1262, 0
        %1571 = vmatpush.bf16.xpose.msra.mxu0 0
        %1572 = vmatpush.bf16.xpose.msra.mxu0 0
        %1573 = vmatpush.bf16.xpose.msra.mxu0 0
        %1574 = vmatpush.bf16.xpose.msra.mxu0 0
        %1575 = vmatpush.bf16.xpose.msra.mxu0 0
        %1576 = vmatpush.bf16.xpose.msra.mxu0 0
        %1577 = vmatpush.bf16.xpose.msra.mxu0 0
        %1578 = vmatpush.bf16.xpose.msra.mxu0 %v1569
        %1579 = vmatmul.bf16.gmra.mxu0 %v1566
        %v1580 = vpop.f32.mrf.mxu0
        %v1581 = vadd.f32 %v1525, %v1580
        %v1582 = vpop.f32.mrf.mxu0
        %1583 = vdwg.mxu0
        %v1585 = vsel %vm1526, %v1011, 0
        %v1588 = vsel %vm1526, %v1263, 0
        %1590 = vmatpush.bf16.xpose.msra.mxu0 0
        %1591 = vmatpush.bf16.xpose.msra.mxu0 0
        %1592 = vmatpush.bf16.xpose.msra.mxu0 0
        %1593 = vmatpush.bf16.xpose.msra.mxu0 0
        %1594 = vmatpush.bf16.xpose.msra.mxu0 0
        %1595 = vmatpush.bf16.xpose.msra.mxu0 0
        %1596 = vmatpush.bf16.xpose.msra.mxu0 0
        %1597 = vmatpush.bf16.xpose.msra.mxu0 %v1588
        %1598 = vmatmul.bf16.gmra.mxu0 %v1585
        %v1599 = vpop.f32.mrf.mxu0
        %v1600 = vadd.f32 %v1525, %v1599
        %v1601 = vpop.f32.mrf.mxu0
        %1602 = vdwg.mxu0
        %v1604 = vsel %vm1526, %v1012, 0
        %v1607 = vsel %vm1526, %v1264, 0
        %1609 = vmatpush.bf16.xpose.msra.mxu0 0
        %1610 = vmatpush.bf16.xpose.msra.mxu0 0
        %1611 = vmatpush.bf16.xpose.msra.mxu0 0
        %1612 = vmatpush.bf16.xpose.msra.mxu0 0
        %1613 = vmatpush.bf16.xpose.msra.mxu0 0
        %1614 = vmatpush.bf16.xpose.msra.mxu0 0
        %1615 = vmatpush.bf16.xpose.msra.mxu0 0
        %1616 = vmatpush.bf16.xpose.msra.mxu0 %v1607
        %1617 = vmatmul.bf16.gmra.mxu0 %v1604
        %v1618 = vpop.f32.mrf.mxu0
        %v1619 = vadd.f32 %v1525, %v1618
        %v1620 = vpop.f32.mrf.mxu0
        %1621 = vdwg.mxu0
        %v1623 = vsel %vm1526, %v1013, 0
        %v1626 = vsel %vm1526, %v1265, 0
        %1628 = vmatpush.bf16.xpose.msra.mxu0 0
        %1629 = vmatpush.bf16.xpose.msra.mxu0 0
        %1630 = vmatpush.bf16.xpose.msra.mxu0 0
        %1631 = vmatpush.bf16.xpose.msra.mxu0 0
        %1632 = vmatpush.bf16.xpose.msra.mxu0 0
        %1633 = vmatpush.bf16.xpose.msra.mxu0 0
        %1634 = vmatpush.bf16.xpose.msra.mxu0 0
        %1635 = vmatpush.bf16.xpose.msra.mxu0 %v1626
        %1636 = vmatmul.bf16.gmra.mxu0 %v1623
        %v1637 = vpop.f32.mrf.mxu0
        %v1638 = vadd.f32 %v1525, %v1637
        %v1639 = vpop.f32.mrf.mxu0
        %1640 = vdwg.mxu0
        %v1642 = vsel %vm1526, %v1014, 0
        %v1645 = vsel %vm1526, %v1266, 0
        %1647 = vmatpush.bf16.xpose.msra.mxu0 0
        %1648 = vmatpush.bf16.xpose.msra.mxu0 0
        %1649 = vmatpush.bf16.xpose.msra.mxu0 0
        %1650 = vmatpush.bf16.xpose.msra.mxu0 0
        %1651 = vmatpush.bf16.xpose.msra.mxu0 0
        %1652 = vmatpush.bf16.xpose.msra.mxu0 0
        %1653 = vmatpush.bf16.xpose.msra.mxu0 0
        %1654 = vmatpush.bf16.xpose.msra.mxu0 %v1645
        %1655 = vmatmul.bf16.gmra.mxu0 %v1642
        %v1656 = vpop.f32.mrf.mxu0
        %v1657 = vadd.f32 %v1525, %v1656
        %v1658 = vpop.f32.mrf.mxu0
        %1659 = vdwg.mxu0
        %v1661 = vsel %vm1526, %v1015, 0
        %v1664 = vsel %vm1526, %v1267, 0
        %1666 = vmatpush.bf16.xpose.msra.mxu0 0
        %1667 = vmatpush.bf16.xpose.msra.mxu0 0
        %1668 = vmatpush.bf16.xpose.msra.mxu0 0
        %1669 = vmatpush.bf16.xpose.msra.mxu0 0
        %1670 = vmatpush.bf16.xpose.msra.mxu0 0
        %1671 = vmatpush.bf16.xpose.msra.mxu0 0
        %1672 = vmatpush.bf16.xpose.msra.mxu0 0
        %1673 = vmatpush.bf16.xpose.msra.mxu0 %v1664
        %1674 = vmatmul.bf16.gmra.mxu0 %v1661
        %v1675 = vpop.f32.mrf.mxu0
        %v1676 = vadd.f32 %v1525, %v1675
        %v1677 = vpop.f32.mrf.mxu0
        %1678 = vdwg.mxu0
        %v1679 = vsel %vm1526, %v1543, -inf
        %1680 = vmax.xlane.f32.xlu0 %v1679
        %v1681 = vpop.xlane.xlu0 %1680
        %v1682 = vsel %vm1526, %v1562, -inf
        %1683 = vmax.xlane.f32.xlu0 %v1682
        %v1684 = vpop.xlane.xlu0 %1683
        %v1685 = vsel %vm1526, %v1581, -inf
        %1686 = vmax.xlane.f32.xlu0 %v1685
        %v1687 = vpop.xlane.xlu0 %1686
        %v1688 = vsel %vm1526, %v1600, -inf
        %1689 = vmax.xlane.f32.xlu0 %v1688
        %v1690 = vpop.xlane.xlu0 %1689
        %v1691 = vsel %vm1526, %v1619, -inf
        %1692 = vmax.xlane.f32.xlu0 %v1691
        %v1693 = vpop.xlane.xlu0 %1692
        %v1694 = vsel %vm1526, %v1638, -inf
        %1695 = vmax.xlane.f32.xlu0 %v1694
        %v1696 = vpop.xlane.xlu0 %1695
        %v1697 = vsel %vm1526, %v1657, -inf
        %1698 = vmax.xlane.f32.xlu0 %v1697
        %v1699 = vpop.xlane.xlu0 %1698
        %v1700 = vsel %vm1526, %v1676, -inf
        %1701 = vmax.xlane.f32.xlu0 %v1700
        %v1702 = vpop.xlane.xlu0 %1701
        %v1703 = vsub.f32 %v1543, %v1681
        %v1704 = vsub.f32 %v1562, %v1684
        %v1705 = vsub.f32 %v1581, %v1687
        %v1706 = vsub.f32 %v1600, %v1690
        %v1707 = vsub.f32 %v1619, %v1693
        %v1708 = vsub.f32 %v1638, %v1696
        %v1709 = vsub.f32 %v1657, %v1699
        %v1710 = vsub.f32 %v1676, %v1702
        %v1711 = vmul.f32 %v1703, 1.442695
        %v1712 = vpow.pop %v1711
        %v1713 = vmul.f32 %v1704, 1.442695
        %v1714 = vpow.pop %v1713
        %v1715 = vmul.f32 %v1705, 1.442695
        %v1716 = vpow.pop %v1715
        %v1717 = vmul.f32 %v1706, 1.442695
        %v1718 = vpow.pop %v1717
        %v1719 = vmul.f32 %v1707, 1.442695
        %v1720 = vpow.pop %v1719
        %v1721 = vmul.f32 %v1708, 1.442695
        %v1722 = vpow.pop %v1721
        %v1723 = vmul.f32 %v1709, 1.442695
        %v1724 = vpow.pop %v1723
        %v1725 = vmul.f32 %v1710, 1.442695
        %v1726 = vpow.pop %v1725
        %v1727 = vsel %vm1526, %v1712, 0.0
        %1728 = vadd.xlane.f32.xlu0 %v1727
        %v1729 = vpop.xlane.xlu0 %1728
        %v1730 = vsel %vm1526, %v1714, 0.0
        %1731 = vadd.xlane.f32.xlu0 %v1730
        %v1732 = vpop.xlane.xlu0 %1731
        %v1733 = vsel %vm1526, %v1716, 0.0
        %1734 = vadd.xlane.f32.xlu0 %v1733
        %v1735 = vpop.xlane.xlu0 %1734
        %v1736 = vsel %vm1526, %v1718, 0.0
        %1737 = vadd.xlane.f32.xlu0 %v1736
        %v1738 = vpop.xlane.xlu0 %1737
        %v1739 = vsel %vm1526, %v1720, 0.0
        %1740 = vadd.xlane.f32.xlu0 %v1739
        %v1741 = vpop.xlane.xlu0 %1740
        %v1742 = vsel %vm1526, %v1722, 0.0
        %1743 = vadd.xlane.f32.xlu0 %v1742
        %v1744 = vpop.xlane.xlu0 %1743
        %v1745 = vsel %vm1526, %v1724, 0.0
        %1746 = vadd.xlane.f32.xlu0 %v1745
        %v1747 = vpop.xlane.xlu0 %1746
        %v1748 = vsel %vm1526, %v1726, 0.0
        %1749 = vadd.xlane.f32.xlu0 %v1748
        %v1750 = vpop.xlane.xlu0 %1749
        %v1751 = vpack.c.bf16 %v1712, %v1712
        %v1752 = vpack.c.bf16 %v1714, %v1714
        %v1753 = vpack.c.bf16 %v1716, %v1716
        %v1754 = vpack.c.bf16 %v1718, %v1718
        %v1755 = vpack.c.bf16 %v1720, %v1720
        %v1756 = vpack.c.bf16 %v1722, %v1722
        %v1757 = vpack.c.bf16 %v1724, %v1724
        %v1758 = vpack.c.bf16 %v1726, %v1726
        %v1760 = vsel %vm1526, %v1751, 0
        %vm1762 = vcmask 1043456
        %v1764 = vsel %vm1762, %v1512, 0
        %1766 = vmatpush.bf16.msra.mxu0 0
        %1767 = vmatpush.bf16.msra.mxu0 0
        %1768 = vmatpush.bf16.msra.mxu0 0
        %1769 = vmatpush.bf16.msra.mxu0 0
        %1770 = vmatpush.bf16.msra.mxu0 0
        %1771 = vmatpush.bf16.msra.mxu0 0
        %1772 = vmatpush.bf16.msra.mxu0 0
        %1773 = vmatpush.bf16.msra.mxu0 %v1764
        %1774 = vmatmul.bf16.gmra.mxu0 %v1760
        %v1775 = vpop.f32.mrf.mxu0
        %v1776 = vadd.f32 0.0, %v1775
        %v1777 = vpop.f32.mrf.mxu0
        %1778 = vdwg.mxu0
        %v1780 = vsel %vm1526, %v1752, 0
        %v1783 = vsel %vm1762, %v1513, 0
        %1785 = vmatpush.bf16.msra.mxu0 0
        %1786 = vmatpush.bf16.msra.mxu0 0
        %1787 = vmatpush.bf16.msra.mxu0 0
        %1788 = vmatpush.bf16.msra.mxu0 0
        %1789 = vmatpush.bf16.msra.mxu0 0
        %1790 = vmatpush.bf16.msra.mxu0 0
        %1791 = vmatpush.bf16.msra.mxu0 0
        %1792 = vmatpush.bf16.msra.mxu0 %v1783
        %1793 = vmatmul.bf16.gmra.mxu0 %v1780
        %v1794 = vpop.f32.mrf.mxu0
        %v1795 = vadd.f32 0.0, %v1794
        %v1796 = vpop.f32.mrf.mxu0
        %1797 = vdwg.mxu0
        %v1799 = vsel %vm1526, %v1753, 0
        %v1802 = vsel %vm1762, %v1514, 0
        %1804 = vmatpush.bf16.msra.mxu0 0
        %1805 = vmatpush.bf16.msra.mxu0 0
        %1806 = vmatpush.bf16.msra.mxu0 0
        %1807 = vmatpush.bf16.msra.mxu0 0
        %1808 = vmatpush.bf16.msra.mxu0 0
        %1809 = vmatpush.bf16.msra.mxu0 0
        %1810 = vmatpush.bf16.msra.mxu0 0
        %1811 = vmatpush.bf16.msra.mxu0 %v1802
        %1812 = vmatmul.bf16.gmra.mxu0 %v1799
        %v1813 = vpop.f32.mrf.mxu0
        %v1814 = vadd.f32 0.0, %v1813
        %v1815 = vpop.f32.mrf.mxu0
        %1816 = vdwg.mxu0
        %v1818 = vsel %vm1526, %v1754, 0
        %v1821 = vsel %vm1762, %v1515, 0
        %1823 = vmatpush.bf16.msra.mxu0 0
        %1824 = vmatpush.bf16.msra.mxu0 0
        %1825 = vmatpush.bf16.msra.mxu0 0
        %1826 = vmatpush.bf16.msra.mxu0 0
        %1827 = vmatpush.bf16.msra.mxu0 0
        %1828 = vmatpush.bf16.msra.mxu0 0
        %1829 = vmatpush.bf16.msra.mxu0 0
        %1830 = vmatpush.bf16.msra.mxu0 %v1821
        %1831 = vmatmul.bf16.gmra.mxu0 %v1818
        %v1832 = vpop.f32.mrf.mxu0
        %v1833 = vadd.f32 0.0, %v1832
        %v1834 = vpop.f32.mrf.mxu0
        %1835 = vdwg.mxu0
        %v1837 = vsel %vm1526, %v1755, 0
        %v1840 = vsel %vm1762, %v1516, 0
        %1842 = vmatpush.bf16.msra.mxu0 0
        %1843 = vmatpush.bf16.msra.mxu0 0
        %1844 = vmatpush.bf16.msra.mxu0 0
        %1845 = vmatpush.bf16.msra.mxu0 0
        %1846 = vmatpush.bf16.msra.mxu0 0
        %1847 = vmatpush.bf16.msra.mxu0 0
        %1848 = vmatpush.bf16.msra.mxu0 0
        %1849 = vmatpush.bf16.msra.mxu0 %v1840
        %1850 = vmatmul.bf16.gmra.mxu0 %v1837
        %v1851 = vpop.f32.mrf.mxu0
        %v1852 = vadd.f32 0.0, %v1851
        %v1853 = vpop.f32.mrf.mxu0
        %1854 = vdwg.mxu0
        %v1856 = vsel %vm1526, %v1756, 0
        %v1859 = vsel %vm1762, %v1517, 0
        %1861 = vmatpush.bf16.msra.mxu0 0
        %1862 = vmatpush.bf16.msra.mxu0 0
        %1863 = vmatpush.bf16.msra.mxu0 0
        %1864 = vmatpush.bf16.msra.mxu0 0
        %1865 = vmatpush.bf16.msra.mxu0 0
        %1866 = vmatpush.bf16.msra.mxu0 0
        %1867 = vmatpush.bf16.msra.mxu0 0
        %1868 = vmatpush.bf16.msra.mxu0 %v1859
        %1869 = vmatmul.bf16.gmra.mxu0 %v1856
        %v1870 = vpop.f32.mrf.mxu0
        %v1871 = vadd.f32 0.0, %v1870
        %v1872 = vpop.f32.mrf.mxu0
        %1873 = vdwg.mxu0
        %v1875 = vsel %vm1526, %v1757, 0
        %v1878 = vsel %vm1762, %v1518, 0
        %1880 = vmatpush.bf16.msra.mxu0 0
        %1881 = vmatpush.bf16.msra.mxu0 0
        %1882 = vmatpush.bf16.msra.mxu0 0
        %1883 = vmatpush.bf16.msra.mxu0 0
        %1884 = vmatpush.bf16.msra.mxu0 0
        %1885 = vmatpush.bf16.msra.mxu0 0
        %1886 = vmatpush.bf16.msra.mxu0 0
        %1887 = vmatpush.bf16.msra.mxu0 %v1878
        %1888 = vmatmul.bf16.gmra.mxu0 %v1875
        %v1889 = vpop.f32.mrf.mxu0
        %v1890 = vadd.f32 0.0, %v1889
        %v1891 = vpop.f32.mrf.mxu0
        %1892 = vdwg.mxu0
        %v1894 = vsel %vm1526, %v1758, 0
        %v1897 = vsel %vm1762, %v1519, 0
        %1899 = vmatpush.bf16.msra.mxu0 0
        %1900 = vmatpush.bf16.msra.mxu0 0
        %1901 = vmatpush.bf16.msra.mxu0 0
        %1902 = vmatpush.bf16.msra.mxu0 0
        %1903 = vmatpush.bf16.msra.mxu0 0
        %1904 = vmatpush.bf16.msra.mxu0 0
        %1905 = vmatpush.bf16.msra.mxu0 0
        %1906 = vmatpush.bf16.msra.mxu0 %v1897
        %1907 = vmatmul.bf16.gmra.mxu0 %v1894
        %v1908 = vpop.f32.mrf.mxu0
        %v1909 = vadd.f32 0.0, %v1908
        %v1910 = vpop.f32.mrf.mxu0
        %1911 = vdwg.mxu0
        %v1912 = vrcp.pop %v1729
        %v1913 = vrcp.pop %v1732
        %v1914 = vrcp.pop %v1735
        %v1915 = vrcp.pop %v1738
        %v1916 = vrcp.pop %v1741
        %v1917 = vrcp.pop %v1744
        %v1918 = vrcp.pop %v1747
        %v1919 = vrcp.pop %v1750
        %v1920 = vmul.f32 %v1776, %v1912
        %v1921 = vmul.f32 %v1795, %v1913
        %v1922 = vmul.f32 %v1814, %v1914
        %v1923 = vmul.f32 %v1833, %v1915
        %v1924 = vmul.f32 %v1852, %v1916
        %v1925 = vmul.f32 %v1871, %v1917
        %v1926 = vmul.f32 %v1890, %v1918
        %v1927 = vmul.f32 %v1909, %v1919
        %v1928 = vrot.slane %v1922, 4
        %v1929 = vsel %vm788, %v1928, %v1920
        %v1930 = vrot.slane %v1920, 4
        %v1931 = vsel %vm788, %v1922, %v1930
        %v1933 = vunpack.c.l.s4 1983009808
        %v1934 = vunpack.c.0.s8 %v1933
        %v1935 = vperm.slane %v1929, %v1934
        %v1937 = vunpack.c.l.s4 1983009808
        %v1938 = vunpack.c.0.s8 %v1937
        %v1939 = vperm.slane %v1931, %v1938
        %v1940 = vrot.slane %v1923, 4
        %v1941 = vsel %vm788, %v1940, %v1921
        %v1942 = vrot.slane %v1921, 4
        %v1943 = vsel %vm788, %v1923, %v1942
        %v1945 = vunpack.c.l.s4 1983009808
        %v1946 = vunpack.c.0.s8 %v1945
        %v1947 = vperm.slane %v1941, %v1946
        %v1949 = vunpack.c.l.s4 1983009808
        %v1950 = vunpack.c.0.s8 %v1949
        %v1951 = vperm.slane %v1943, %v1950
        %v1952 = vrot.slane %v1947, 4
        %v1953 = vsel %vm788, %v1952, %v1935
        %v1954 = vrot.slane %v1935, 4
        %v1955 = vsel %vm788, %v1947, %v1954
        %v1957 = vunpack.c.l.s4 1934713408
        %v1958 = vunpack.c.0.s8 %v1957
        %v1959 = vperm.slane %v1953, %v1958
        %v1961 = vunpack.c.l.s4 1934713408
        %v1962 = vunpack.c.0.s8 %v1961
        %v1963 = vperm.slane %v1955, %v1962
        %v1964 = vrot.slane %v1951, 4
        %v1965 = vsel %vm788, %v1964, %v1939
        %v1966 = vrot.slane %v1939, 4
        %v1967 = vsel %vm788, %v1951, %v1966
        %v1969 = vunpack.c.l.s4 1934713408
        %v1970 = vunpack.c.0.s8 %v1969
        %v1971 = vperm.slane %v1965, %v1970
        %v1973 = vunpack.c.l.s4 1934713408
        %v1974 = vunpack.c.0.s8 %v1973
        %v1975 = vperm.slane %v1967, %v1974
        %v1976 = vrot.slane %v1959, 4
        %v1977 = vsel %vm788, 0.0, %v1976
        %v1978 = vrot.slane %v1963, 4
        %v1979 = vsel %vm788, 0.0, %v1978
        %v1980 = vrot.slane %v1971, 4
        %v1981 = vsel %vm788, 0.0, %v1980
        %v1982 = vrot.slane %v1975, 4
        %v1983 = vsel %vm788, 0.0, %v1982
        %v1984 = vrot.slane %v1926, 4
        %v1985 = vsel %vm788, %v1984, %v1924
        %v1986 = vrot.slane %v1924, 4
        %v1987 = vsel %vm788, %v1926, %v1986
        %v1989 = vunpack.c.l.s4 1983009808
        %v1990 = vunpack.c.0.s8 %v1989
        %v1991 = vperm.slane %v1985, %v1990
        %v1993 = vunpack.c.l.s4 1983009808
        %v1994 = vunpack.c.0.s8 %v1993
        %v1995 = vperm.slane %v1987, %v1994
        %v1996 = vrot.slane %v1927, 4
        %v1997 = vsel %vm788, %v1996, %v1925
        %v1998 = vrot.slane %v1925, 4
        %v1999 = vsel %vm788, %v1927, %v1998
        %v2001 = vunpack.c.l.s4 1983009808
        %v2002 = vunpack.c.0.s8 %v2001
        %v2003 = vperm.slane %v1997, %v2002
        %v2005 = vunpack.c.l.s4 1983009808
        %v2006 = vunpack.c.0.s8 %v2005
        %v2007 = vperm.slane %v1999, %v2006
        %v2008 = vrot.slane %v2003, 4
        %v2009 = vsel %vm788, %v2008, %v1991
        %v2010 = vrot.slane %v1991, 4
        %v2011 = vsel %vm788, %v2003, %v2010
        %v2013 = vunpack.c.l.s4 1934713408
        %v2014 = vunpack.c.0.s8 %v2013
        %v2015 = vperm.slane %v2009, %v2014
        %v2017 = vunpack.c.l.s4 1934713408
        %v2018 = vunpack.c.0.s8 %v2017
        %v2019 = vperm.slane %v2011, %v2018
        %v2020 = vrot.slane %v2007, 4
        %v2021 = vsel %vm788, %v2020, %v1995
        %v2022 = vrot.slane %v1995, 4
        %v2023 = vsel %vm788, %v2007, %v2022
        %v2025 = vunpack.c.l.s4 1934713408
        %v2026 = vunpack.c.0.s8 %v2025
        %v2027 = vperm.slane %v2021, %v2026
        %v2029 = vunpack.c.l.s4 1934713408
        %v2030 = vunpack.c.0.s8 %v2029
        %v2031 = vperm.slane %v2023, %v2030
        %v2032 = vrot.slane %v2015, 4
        %v2033 = vsel %vm788, 0.0, %v2032
        %v2034 = vrot.slane %v2019, 4
        %v2035 = vsel %vm788, 0.0, %v2034
        %v2036 = vrot.slane %v2027, 4
        %v2037 = vsel %vm788, 0.0, %v2036
        %v2038 = vrot.slane %v2031, 4
        %v2039 = vsel %vm788, 0.0, %v2038
        %v2040 = vsel %vm788, %v1978, %v1959
        %v2042 = vunpack.c.l.s4 1983009808
        %v2043 = vunpack.c.0.s8 %v2042
        %v2044 = vperm.slane %v2040, %v2043
        %v2045 = vrot.slane %v1979, 4
        %v2046 = vsel %vm788, %v2045, %v1977
        %v2048 = vunpack.c.l.s4 1983009808
        %v2049 = vunpack.c.0.s8 %v2048
        %v2050 = vperm.slane %v2046, %v2049
        %v2051 = vsel %vm788, %v1982, %v1971
        %v2053 = vunpack.c.l.s4 1983009808
        %v2054 = vunpack.c.0.s8 %v2053
        %v2055 = vperm.slane %v2051, %v2054
        %v2056 = vrot.slane %v1983, 4
        %v2057 = vsel %vm788, %v2056, %v1981
        %v2059 = vunpack.c.l.s4 1983009808
        %v2060 = vunpack.c.0.s8 %v2059
        %v2061 = vperm.slane %v2057, %v2060
        %v2062 = vrot.slane %v2050, 4
        %v2063 = vsel %vm788, %v2062, %v2044
        %v2064 = vrot.slane %v2044, 4
        %v2065 = vsel %vm788, %v2050, %v2064
        %v2067 = vunpack.c.l.s4 1934713408
        %v2068 = vunpack.c.0.s8 %v2067
        %v2069 = vperm.slane %v2063, %v2068
        %v2071 = vunpack.c.l.s4 1934713408
        %v2072 = vunpack.c.0.s8 %v2071
        %v2073 = vperm.slane %v2065, %v2072
        %v2074 = vrot.slane %v2061, 4
        %v2075 = vsel %vm788, %v2074, %v2055
        %v2076 = vrot.slane %v2055, 4
        %v2077 = vsel %vm788, %v2061, %v2076
        %v2079 = vunpack.c.l.s4 1934713408
        %v2080 = vunpack.c.0.s8 %v2079
        %v2081 = vperm.slane %v2075, %v2080
        %v2083 = vunpack.c.l.s4 1934713408
        %v2084 = vunpack.c.0.s8 %v2083
        %v2085 = vperm.slane %v2077, %v2084
        %v2086 = vrot.slane %v2081, 4
        %v2087 = vsel %vm788, %v2086, %v2069
        %v2088 = vrot.slane %v2069, 4
        %v2089 = vsel %vm788, %v2081, %v2088
        %v2090 = vrot.slane %v2085, 4
        %v2091 = vsel %vm788, %v2090, %v2073
        %v2092 = vrot.slane %v2073, 4
        %v2093 = vsel %vm788, %v2085, %v2092
        %v2094 = vsel %vm788, %v2034, %v2015
        %v2096 = vunpack.c.l.s4 1983009808
        %v2097 = vunpack.c.0.s8 %v2096
        %v2098 = vperm.slane %v2094, %v2097
        %v2099 = vrot.slane %v2035, 4
        %v2100 = vsel %vm788, %v2099, %v2033
        %v2102 = vunpack.c.l.s4 1983009808
        %v2103 = vunpack.c.0.s8 %v2102
        %v2104 = vperm.slane %v2100, %v2103
        %v2105 = vsel %vm788, %v2038, %v2027
        %v2107 = vunpack.c.l.s4 1983009808
        %v2108 = vunpack.c.0.s8 %v2107
        %v2109 = vperm.slane %v2105, %v2108
        %v2110 = vrot.slane %v2039, 4
        %v2111 = vsel %vm788, %v2110, %v2037
        %v2113 = vunpack.c.l.s4 1983009808
        %v2114 = vunpack.c.0.s8 %v2113
        %v2115 = vperm.slane %v2111, %v2114
        %v2116 = vrot.slane %v2104, 4
        %v2117 = vsel %vm788, %v2116, %v2098
        %v2118 = vrot.slane %v2098, 4
        %v2119 = vsel %vm788, %v2104, %v2118
        %v2121 = vunpack.c.l.s4 1934713408
        %v2122 = vunpack.c.0.s8 %v2121
        %v2123 = vperm.slane %v2117, %v2122
        %v2125 = vunpack.c.l.s4 1934713408
        %v2126 = vunpack.c.0.s8 %v2125
        %v2127 = vperm.slane %v2119, %v2126
        %v2128 = vrot.slane %v2115, 4
        %v2129 = vsel %vm788, %v2128, %v2109
        %v2130 = vrot.slane %v2109, 4
        %v2131 = vsel %vm788, %v2115, %v2130
        %v2133 = vunpack.c.l.s4 1934713408
        %v2134 = vunpack.c.0.s8 %v2133
        %v2135 = vperm.slane %v2129, %v2134
        %v2137 = vunpack.c.l.s4 1934713408
        %v2138 = vunpack.c.0.s8 %v2137
        %v2139 = vperm.slane %v2131, %v2138
        %v2140 = vrot.slane %v2135, 4
        %v2141 = vsel %vm788, %v2140, %v2123
        %v2142 = vrot.slane %v2123, 4
        %v2143 = vsel %vm788, %v2135, %v2142
        %v2144 = vrot.slane %v2139, 4
        %v2145 = vsel %vm788, %v2144, %v2127
        %v2146 = vrot.slane %v2127, 4
        %v2147 = vsel %vm788, %v2139, %v2146
        %2150 = vrot.lane.b32.xlu0 %v2089, 8
        %v2151 = vpop.permute.xlu0 %2150
        %2152 = vrot.lane.b32.xlu0 %v2143, 8
        %v2153 = vpop.permute.xlu0 %2152
        %2158 = vrot.lane.b32.xlu0 %v2091, 16
        %v2159 = vpop.permute.xlu0 %2158
        %2160 = vrot.lane.b32.xlu0 %v2145, 16
        %v2161 = vpop.permute.xlu0 %2160
        %2166 = vrot.lane.b32.xlu0 %v2093, 24
        %v2167 = vpop.permute.xlu0 %2166
        %2168 = vrot.lane.b32.xlu0 %v2147, 24
        %v2169 = vpop.permute.xlu0 %2168
        %v2172 = vsel %vm1526, %v2087, %v2151
        %v2173 = vsel %vm1526, %v2141, %v2153
        %vm2174 = vcmask 130048
        %v2175 = vsel %vm2174, %v2172, %v2159
        %v2176 = vsel %vm2174, %v2173, %v2161
        %vm2177 = vcmask 195584
        %v2178 = vsel %vm2177, %v2175, %v2167
        %v2179 = vsel %vm2177, %v2176, %v2169
        %v2180 = vpack.c.bf16 %v2179, %v2178
        %v2181 = vld [vmem:[%s627] sm:$0xf]
        %v2182 = vld [vmem:[%s627 + $0x4] sm:$0xf]
        %v2183 = vld [vmem:[%s627 + $0x8] sm:$0xf]
        %v2184 = vld [vmem:[%s627 + $0xc] sm:$0xf]
        %v2185 = vld [vmem:[%s630] sm:$0x1]
        %v2187 = vperm.slane %v2185, 0
        %v2193 = vunpack.c.l.b16 %v2181
        %v2194 = vunpack.c.l.b16 %v2182
        %v2195 = vunpack.c.l.b16 %v2183
        %v2196 = vunpack.c.l.b16 %v2184
        %v2197 = vpack.c.b16 %v2194, %v2193
        %v2198 = vpack.c.b16 %v2196, %v2195
        %v2202 = vsel %vm667, %v2180, 0
        %2204 = vmatpush.bf16.msra.mxu0 0
        %2205 = vmatpush.bf16.msra.mxu0 0
        %2206 = vmatpush.bf16.msra.mxu0 0
        %2207 = vmatpush.bf16.msra.mxu0 0
        %2208 = vmatpush.bf16.msra.mxu0 0
        %2209 = vmatpush.bf16.msra.mxu0 0
        %2210 = vmatpush.bf16.msra.mxu0 %v2198
        %2211 = vmatpush.bf16.msra.mxu0 %v2197
        %2212 = vmatmul.bf16.gmra.mxu0 %v2202
        %v2213 = vpop.f32.mrf.mxu0
        %v2214 = vadd.f32 %v2187, %v2213
        %v2215 = vpop.f32.mrf.mxu0
        %v2216 = vadd.f32 %v2187, %v2215
        %2217 = vdwg.mxu0
        %v2218 = vadd.f32 %v663, %v2214
        %v2219 = vadd.f32 %v664, %v2216
        %v2220 = vld [vmem:[%s633] sm:$0x1]
        %v2221 = vld [vmem:[%s636] sm:$0x1]
        %v2222 = vsel %vm667, %v2218, 0.0
        %2223 = vadd.xlane.f32.xlu0 %v2222
        %v2224 = vpop.xlane.xlu0 %2223
        %v2225 = vsel %vm667, %v2219, 0.0
        %2226 = vadd.xlane.f32.xlu0 %v2225
        %v2227 = vpop.xlane.xlu0 %2226
        %v2228 = vmul.f32 %v2224, %v680
        %v2229 = vmul.f32 %v2227, %v680
        %v2230 = vsub.f32 %v2218, %v2228
        %v2231 = vsub.f32 %v2219, %v2229
        %v2232 = vmul.f32 %v2230, %v2230
        %v2233 = vmul.f32 %v2231, %v2231
        %v2234 = vsel %vm667, %v2232, 0.0
        %2235 = vadd.xlane.f32.xlu0 %v2234
        %v2236 = vpop.xlane.xlu0 %2235
        %v2237 = vsel %vm667, %v2233, 0.0
        %2238 = vadd.xlane.f32.xlu0 %v2237
        %v2239 = vpop.xlane.xlu0 %2238
        %v2240 = vmul.f32 %v2236, %v680
        %v2241 = vmul.f32 %v2239, %v680
        %v2242 = vadd.f32 %v2240, 1e-05
        %v2243 = vadd.f32 %v2241, 1e-05
        %v2244 = vrsqrt.pop %v2242
        %v2245 = vmul.f32 %v2244, %v2242
        %v2246 = vmul.f32 %v2245, %v2244
        %v2247 = vmul.f32 0.5, %v2246
        %v2248 = vsub.f32 1.5, %v2247
        %v2249 = vmul.f32 %v2244, %v2248
        %vm2250 = vweird.f32 %v2242
        %vm2251 = vweird.f32 %v2244
        %vm2252 = vmor %vm2250, %vm2251
        %v2253 = vsel %vm2252, %v2244, %v2249
        %v2254 = vrsqrt.pop %v2243
        %v2255 = vmul.f32 %v2254, %v2243
        %v2256 = vmul.f32 %v2255, %v2254
        %v2257 = vmul.f32 0.5, %v2256
        %v2258 = vsub.f32 1.5, %v2257
        %v2259 = vmul.f32 %v2254, %v2258
        %vm2260 = vweird.f32 %v2243
        %vm2261 = vweird.f32 %v2254
        %vm2262 = vmor %vm2260, %vm2261
        %v2263 = vsel %vm2262, %v2254, %v2259
        %v2264 = vmul.f32 %v2230, %v2253
        %v2265 = vmul.f32 %v2231, %v2263
        %v2267 = vperm.slane %v2220, 0
        %v2269 = vmul.f32 %v2264, %v2267
        %v2270 = vmul.f32 %v2265, %v2267
        %v2272 = vperm.slane %v2221, 0
        %v2274 = vadd.f32 %v2269, %v2272
        %v2275 = vadd.f32 %v2270, %v2272
        %v2276 = vpack.c.bf16 %v2275, %v2274
        %v2277 = vld [vmem:[%s641] sm:$0xf]
        %v2278 = vld [vmem:[%s641 + $0x4] sm:$0xf]
        %v2279 = vld [vmem:[%s641 + $0x8] sm:$0xf]
        %v2280 = vld [vmem:[%s641 + $0xc] sm:$0xf]
        %v2281 = vld [vmem:[%s644] sm:$0x1]
        %v2283 = vperm.slane %v2281, 0
        %v2289 = vunpack.c.l.b16 %v2277
        %v2290 = vunpack.c.l.b16 %v2278
        %v2291 = vunpack.c.l.b16 %v2279
        %v2292 = vunpack.c.l.b16 %v2280
        %v2293 = vpack.c.b16 %v2290, %v2289
        %v2294 = vpack.c.b16 %v2292, %v2291
        %v2298 = vsel %vm667, %v2276, 0
        %2300 = vmatpush.bf16.msra.mxu0 0
        %2301 = vmatpush.bf16.msra.mxu0 0
        %2302 = vmatpush.bf16.msra.mxu0 0
        %2303 = vmatpush.bf16.msra.mxu0 0
        %2304 = vmatpush.bf16.msra.mxu0 0
        %2305 = vmatpush.bf16.msra.mxu0 0
        %2306 = vmatpush.bf16.msra.mxu0 %v2294
        %2307 = vmatpush.bf16.msra.mxu0 %v2293
        %2308 = vmatmul.bf16.gmra.mxu0 %v2298
        %v2309 = vpop.f32.mrf.mxu0
        %v2310 = vadd.f32 %v2283, %v2309
        %v2311 = vpop.f32.mrf.mxu0
        %v2312 = vadd.f32 %v2283, %v2311
        %2313 = vdwg.mxu0
        %v2314 = vmul.f32 %v2310, 0.5
        %v2315 = vmul.f32 %v2312, 0.5
        %v2316 = vmul.f32 %v2310, 0.70710677
        %v2317 = vmul.f32 %v2312, 0.70710677
        %vm2318 = vcmp.ge.f32.partialorder %v2316, 0.0
        %vm2319 = vcmp.ge.f32.partialorder %v2317, 0.0
        %v2320 = vsel %vm2318, 1.0, -1.0
        %v2321 = vsel %vm2319, 1.0, -1.0
        %v2322 = vand.u32 2147483647, %v2316
        %v2323 = vand.u32 2147483647, %v2317
        %v2324 = vmul.f32 %v2322, 0.3275911
        %v2325 = vmul.f32 %v2323, 0.3275911
        %v2326 = vadd.f32 %v2324, 1.0
        %v2327 = vadd.f32 %v2325, 1.0
        %v2328 = vrcp.pop %v2326
        %v2329 = vrcp.pop %v2327
        %v2330 = vmul.f32 %v2328, 1.0614054
        %v2331 = vmul.f32 %v2329, 1.0614054
        %v2332 = vadd.f32 %v2330, -1.4531521
        %v2333 = vadd.f32 %v2331, -1.4531521
        %v2334 = vmul.f32 %v2332, %v2328
        %v2335 = vmul.f32 %v2333, %v2329
        %v2336 = vadd.f32 %v2334, 1.4214138
        %v2337 = vadd.f32 %v2335, 1.4214138
        %v2338 = vmul.f32 %v2336, %v2328
        %v2339 = vmul.f32 %v2337, %v2329
        %v2340 = vadd.f32 %v2338, -0.28449672
        %v2341 = vadd.f32 %v2339, -0.28449672
        %v2342 = vmul.f32 %v2340, %v2328
        %v2343 = vmul.f32 %v2341, %v2329
        %v2344 = vadd.f32 %v2342, 0.2548296
        %v2345 = vadd.f32 %v2343, 0.2548296
        %v2346 = vmul.f32 %v2344, %v2328
        %v2347 = vmul.f32 %v2345, %v2329
        %v2348 = vsub.f32 0.0, %v2322
        %v2349 = vsub.f32 0.0, %v2323
        %v2350 = vmul.f32 %v2348, %v2322
        %v2351 = vmul.f32 %v2349, %v2323
        %v2352 = vmul.f32 %v2350, 1.442695
        %v2353 = vpow.pop %v2352
        %v2354 = vmul.f32 %v2351, 1.442695
        %v2355 = vpow.pop %v2354
        %v2356 = vmul.f32 %v2346, %v2353
        %v2357 = vmul.f32 %v2347, %v2355
        %v2358 = vsub.f32 1.0, %v2356
        %v2359 = vsub.f32 1.0, %v2357
        %v2360 = vmul.f32 %v2320, %v2358
        %v2361 = vmul.f32 %v2321, %v2359
        %v2362 = vadd.f32 %v2360, 1.0
        %v2363 = vadd.f32 %v2361, 1.0
        %v2364 = vmul.f32 %v2314, %v2362
        %v2365 = vmul.f32 %v2315, %v2363
        %v2366 = vpack.c.bf16 %v2365, %v2364
        %v2367 = vld [vmem:[%s649] sm:$0xf]
        %v2368 = vld [vmem:[%s649 + $0x4] sm:$0xf]
        %v2369 = vld [vmem:[%s649 + $0x8] sm:$0xf]
        %v2370 = vld [vmem:[%s649 + $0xc] sm:$0xf]
        %v2371 = vld [vmem:[%s649 + $0x10] sm:$0xf]
        %v2372 = vld [vmem:[%s649 + $0x14] sm:$0xf]
        %v2373 = vld [vmem:[%s649 + $0x18] sm:$0xf]
        %v2374 = vld [vmem:[%s649 + $0x1c] sm:$0xf]
        %v2375 = vld [vmem:[%s649 + $0x20] sm:$0xf]
        %v2376 = vld [vmem:[%s649 + $0x24] sm:$0xf]
        %v2377 = vld [vmem:[%s649 + $0x28] sm:$0xf]
        %v2378 = vld [vmem:[%s649 + $0x2c] sm:$0xf]
        %v2379 = vld [vmem:[%s649 + $0x30] sm:$0xf]
        %v2380 = vld [vmem:[%s649 + $0x34] sm:$0xf]
        %v2381 = vld [vmem:[%s649 + $0x38] sm:$0xf]
        %v2382 = vld [vmem:[%s649 + $0x3c] sm:$0xf]
        %v2383 = vld [vmem:[%s652] sm:$0x1]
        %v2385 = vperm.slane %v2383, 0
        %v2403 = vunpack.c.l.b16 %v2367
        %v2404 = vunpack.c.l.b16 %v2368
        %v2405 = vunpack.c.l.b16 %v2369
        %v2406 = vunpack.c.l.b16 %v2370
        %v2407 = vunpack.c.l.b16 %v2371
        %v2408 = vunpack.c.l.b16 %v2372
        %v2409 = vunpack.c.l.b16 %v2373
        %v2410 = vunpack.c.l.b16 %v2374
        %v2411 = vunpack.c.l.b16 %v2375
        %v2412 = vunpack.c.l.b16 %v2376
        %v2413 = vunpack.c.l.b16 %v2377
        %v2414 = vunpack.c.l.b16 %v2378
        %v2415 = vunpack.c.l.b16 %v2379
        %v2416 = vunpack.c.l.b16 %v2380
        %v2417 = vunpack.c.l.b16 %v2381
        %v2418 = vunpack.c.l.b16 %v2382
        %v2419 = vpack.c.b16 %v2404, %v2403
        %v2420 = vpack.c.b16 %v2406, %v2405
        %v2421 = vpack.c.b16 %v2408, %v2407
        %v2422 = vpack.c.b16 %v2410, %v2409
        %v2423 = vpack.c.b16 %v2412, %v2411
        %v2424 = vpack.c.b16 %v2414, %v2413
        %v2425 = vpack.c.b16 %v2416, %v2415
        %v2426 = vpack.c.b16 %v2418, %v2417
        %2435 = vmatpush.bf16.msra.mxu0 %v2426
        %2436 = vmatpush.bf16.msra.mxu0 %v2425
        %2437 = vmatpush.bf16.msra.mxu0 %v2424
        %2438 = vmatpush.bf16.msra.mxu0 %v2423
        %2439 = vmatpush.bf16.msra.mxu0 %v2422
        %2440 = vmatpush.bf16.msra.mxu0 %v2421
        %2441 = vmatpush.bf16.msra.mxu0 %v2420
        %2442 = vmatpush.bf16.msra.mxu0 %v2419
        %2443 = vmatmul.bf16.gmra.mxu0 %v2366
        %v2444 = vpop.f32.mrf.mxu0
        %v2445 = vadd.f32 %v2385, %v2444
        %v2446 = vpop.f32.mrf.mxu0
        %v2447 = vadd.f32 %v2385, %v2446
        %2448 = vdwg.mxu0
        %v2449 = vadd.f32 %v2218, %v2445
        %v2450 = vadd.f32 %v2219, %v2447
        %2451 = vst.msk [vmem:[#allocation2] sm:$0xff] %vm667, %v2449
        %2452 = vst.msk [vmem:[#allocation2 + $0x8] sm:$0xff] %vm667, %v2450
        %v2453 = vld [vmem:[%s13] sm:$0x1]
        %v2454 = vld [vmem:[%s14] sm:$0x1]
        %v2457 = vrot.slane %v2450, 7
        %vm2460 = vcmask 261127
        %v2461 = vsel %vm2460, %v2449, 0.0
        %2462 = vadd.xlane.f32.xlu0 %v2461
        %v2463 = vpop.xlane.xlu0 %2462
        %vm2464 = vcmask 253952
        %v2465 = vsel %vm2464, %v2457, 0.0
        %2466 = vadd.xlane.f32.xlu0 %v2465
        %v2467 = vpop.xlane.xlu0 %2466
        %v2468 = vmul.f32 %v2463, %v680
        %v2469 = vmul.f32 %v2467, %v680
        %v2472 = vrot.slane %v2469, 1
        %v2475 = vsub.f32 %v2449, %v2468
        %v2476 = vsub.f32 %v2450, %v2472
        %v2477 = vmul.f32 %v2475, %v2475
        %v2478 = vmul.f32 %v2476, %v2476
        %v2481 = vrot.slane %v2478, 7
        %v2484 = vsel %vm2460, %v2477, 0.0
        %2485 = vadd.xlane.f32.xlu0 %v2484
        %v2486 = vpop.xlane.xlu0 %2485
        %v2487 = vsel %vm2464, %v2481, 0.0
        %2488 = vadd.xlane.f32.xlu0 %v2487
        %v2489 = vpop.xlane.xlu0 %2488
        %v2490 = vmul.f32 %v2486, %v680
        %v2491 = vmul.f32 %v2489, %v680
        %v2492 = vadd.f32 %v2490, 1e-05
        %v2493 = vadd.f32 %v2491, 1e-05
        %v2494 = vrsqrt.pop %v2492
        %v2495 = vmul.f32 %v2494, %v2492
        %v2496 = vmul.f32 %v2495, %v2494
        %v2497 = vmul.f32 0.5, %v2496
        %v2498 = vsub.f32 1.5, %v2497
        %v2499 = vmul.f32 %v2494, %v2498
        %vm2500 = vweird.f32 %v2492
        %vm2501 = vweird.f32 %v2494
        %vm2502 = vmor %vm2500, %vm2501
        %v2503 = vsel %vm2502, %v2494, %v2499
        %v2504 = vrsqrt.pop %v2493
        %v2505 = vmul.f32 %v2504, %v2493
        %v2506 = vmul.f32 %v2505, %v2504
        %v2507 = vmul.f32 0.5, %v2506
        %v2508 = vsub.f32 1.5, %v2507
        %v2509 = vmul.f32 %v2504, %v2508
        %vm2510 = vweird.f32 %v2493
        %vm2511 = vweird.f32 %v2504
        %vm2512 = vmor %vm2510, %vm2511
        %v2513 = vsel %vm2512, %v2504, %v2509
        %v2516 = vrot.slane %v2513, 1
        %v2519 = vmul.f32 %v2475, %v2503
        %v2520 = vmul.f32 %v2476, %v2516
        %v2522 = vperm.slane %v2453, 0
        %v2524 = vmul.f32 %v2519, %v2522
        %v2525 = vmul.f32 %v2520, %v2522
        %v2527 = vperm.slane %v2454, 0
        %v2529 = vadd.f32 %v2524, %v2527
        %v2530 = vadd.f32 %v2525, %v2527
        %v2533 = vrot.slane %v2530, 7
        %2536 = vst.msk [vmem:[#allocation3 - $0x7] sm:$0x80] %vm2460, %v2529
        %2537 = vst.msk [vmem:[#allocation3 + $0x1] sm:$0x1] %vm2464, %v2533
        // Predicated region
        $region85: #{tpu_custom_call.1} parent=79 // pred_check
          %p2538 = pneg %p415
        $region86: #{tpu_custom_call.1} parent=79 // pred_check_branch
          %2540 = sbr.rel (%p2538) target = $region88
        $region87: #{tpu_custom_call.1} parent=79 // pred_region
          %2542 = vsyncadd [#allocation4], 0
          %s2544 = sshll.u32 [#allocation3], 4
          %s2545 = int_to_ptr.vmem [resolvable:$true] %s2544
          %s2546 = sshll.u32 %s15, 4
          %s2547 = int_to_ptr.hbm [resolvable:$true] %s2546
          %2549 = dma.vmem_to_hbm [thread:$0]  %s2545, 32, %s2547, [#allocation4]
        $region88: #{tpu_custom_call.1} parent=79 // pred_fallthru
          _
        // Predicated region
        $region89: #{tpu_custom_call.1} parent=79 // pred_check
          %p2550 = pneg %p415
        $region90: #{tpu_custom_call.1} parent=79 // pred_check_branch
          %2552 = sbr.rel (%p2550) target = $region92
        $region91: #{tpu_custom_call.1} parent=79 // pred_region
          %2554 = dma.done [#allocation4], 32
        $region92: #{tpu_custom_call.1} parent=79 // pred_fallthru
          _
      $region80: #{tpu_custom_call.1} parent=5 // pred_fallthru
        _
      %p2555 = scmp.le.s32.totalorder 2, %s22
      // Predicated region
      $region93: #{tpu_custom_call.1} parent=5 // pred_check
        %p2556 = pneg %p2555
      $region94: #{tpu_custom_call.1} parent=5 // pred_check_branch
        %2558 = sbr.rel (%p2556) target = $region96
      $region95: #{tpu_custom_call.1} parent=5 // pred_region
        %s2559 = ssub.s32 %s22, 2
      $region96: #{tpu_custom_call.1} parent=5 // pred_fallthru
        _
    $region6: #{tpu_custom_call.1} parent=1 // loop_footer
      %s26 = sadd.s32 1, %s22
    $region7: #{tpu_custom_call.1} parent=1 // loop_footer_branch
      %21 = sbr.rel target = $region3
    $region8: #{tpu_custom_call.1} parent=1 // loop_exit
      _
    %2560 = vsyncpa [#allocation4], 1
    %s2561 = scalar_lea.sflag [#allocation4], 1
    %2562 = vsyncpa %s2561, 1

</llo_original>
